<compile_context>
chip_gen: v7x
topology: tpu7x:2x2x1
jax: 0.10.0
libtpu: 0.0.40
codegen_flags: <defaults>
</compile_context>

<pallas_src>
import jax
import jax.numpy as jnp
from jax import lax
from jax.experimental import pallas as pl
from jax.experimental.pallas import tpu as pltpu

LANE = 128


def _round_up(x, m):
    return (x + m - 1) // m * m


def _vmem_limit_bytes():
    # Generation-aware scoped-VMEM budget (feedback): ~3/4 of physical VMEM,
    # capped at 100 MiB (v5e/v6e: 128 MiB physical -> 96 MiB; v7x: 64 -> 48 MiB).
    try:
        cap = pltpu.get_tpu_info().vmem_capacity_bytes
    except Exception:
        cap = 64 * 1024 * 1024  # conservative fallback
    return int(min(100 * 1024 * 1024, cap * 3 // 4))


# ----------------------------------------------------------------------------
# ImageVFE kernel: 3x3 same-padded conv + bias + ReLU.
# One (batch, row-tile) block per grid step; conv = 9 accumulated MXU matmuls
# against the halo-padded row tile (no im2col scratch, no gather stores).
# ----------------------------------------------------------------------------
def _image_vfe_kernel(x_ref, w_ref, b_ref, o_ref):
    # x_ref: (TH+2, W+2, Cin) bf16  haloed row tile of the padded image
    # w_ref: (9, Cin, Cout)   bf16  3x3 taps, tap t = dy*3 + dx
    # b_ref: (1, Cout)        f32   bias
    # o_ref: (TH, W, Cout)    f32   unpadded output row tile
    THh, Wp, Cin = x_ref.shape
    TH, W = THh - 2, Wp - 2
    Cout = o_ref.shape[-1]

    x = x_ref[...]                                   # stays bf16 for the MXU
    acc = jnp.zeros((TH * W, Cout), jnp.float32)
    # 9 static taps: every operand is a full-rectangle shifted window of the
    # halo-padded tile (no edge masking, no scratch stores).  MXU has ~10x
    # slack at K=Cin, so the extra matmuls are free relative to im2col stores.
    for dy in range(3):
        for dx in range(3):
            tap = x[dy:dy + TH, dx:dx + W, :].reshape(TH * W, Cin)
            acc = acc + jnp.dot(tap, w_ref[dy * 3 + dx],
                                preferred_element_type=jnp.float32)
    acc = jnp.maximum(acc + b_ref[...], 0.0)         # bias + ReLU in f32
    o_ref[...] = acc.reshape(TH, W, Cout).astype(o_ref.dtype)


def image_vfe(images_nchw, w, b, tile_h=8):
    """images_nchw: (B, Cin, H, W) f32. 3x3 conv (pad=1) + bias + ReLU.
    Returns (B, H, W, Cout) f32."""
    B, Cin, H, W = images_nchw.shape
    Cout = w.shape[-1]

    # Wrapper-side layout pass (fused by XLA): NCHW -> NHWC, bf16 cast, and the
    # 1-pixel conv halo pad — the kernel never touches the halo logic.
    x = jnp.transpose(images_nchw, (0, 2, 3, 1)).astype(jnp.bfloat16)
    x = jnp.pad(x, ((0, 0), (1, 1), (1, 1), (0, 0)))          # (B, H+2, W+2, Cin)

    # H-tiling: TH output rows per grid step (largest divisor of H <= tile_h so
    # blocks tile H exactly).  Each tile's input is TH+2 rows; the 2-row halo is
    # duplicated in this small wrapper gather so BlockSpec windows never overlap.
    # TODO(synk): at realistic camera resolutions, replace the duplicated-halo
    # copy with an element-offset index_map / manual DMA window to avoid the
    # extra HBM pass, and size TH against the per-generation VMEM budget.
    TH = max(d for d in range(1, min(tile_h, H) + 1) if H % d == 0)
    nH = H // TH
    row_idx = jnp.arange(nH)[:, None] * TH + jnp.arange(TH + 2)[None, :]
    x_tiles = x[:, row_idx]                                   # (B, nH, TH+2, W+2, Cin)

    w9 = w.reshape(9, Cin, Cout).astype(jnp.bfloat16)         # tap-major weights
    b2 = b.reshape(1, Cout).astype(jnp.float32)

    # TODO(synk): emit bf16 output instead of f32 if the downstream consumer
    # (ImageFeatureSampler / fusion head) tolerates it — halves writeback bytes.
    out = pl.pallas_call(
        _image_vfe_kernel,
        out_shape=jax.ShapeDtypeStruct((B, H, W, Cout), jnp.float32),
        grid_spec=pltpu.PrefetchScalarGridSpec(
            num_scalar_prefetch=0,
            grid=(B, nH),
            in_specs=[
                pl.BlockSpec((None, None, TH + 2, W + 2, Cin),
                             lambda bi, hi: (bi, hi, 0, 0, 0)),
                pl.BlockSpec((9, Cin, Cout), lambda bi, hi: (0, 0, 0)),
                pl.BlockSpec((1, Cout), lambda bi, hi: (0, 0)),
            ],
            out_specs=pl.BlockSpec((None, TH, W, Cout),
                                   lambda bi, hi: (bi, hi, 0, 0)),
        ),
        compiler_params=pltpu.CompilerParams(
            dimension_semantics=("parallel", "parallel"),
            vmem_limit_bytes=_vmem_limit_bytes(),
        ),
    )(x_tiles, w9, b2)
    return out                                                # (B, H, W, Cout)


# ----------------------------------------------------------------------------
# Radar7PillarVFE kernel: PFN layer = Linear (BN scale folded) -> +shift -> ReLU
# -> max over points, fused into a per-point loop.  One pillar tile per step.
# ----------------------------------------------------------------------------
def _radar_pfn_kernel(x_ref, wt_ref, shift_ref, o_ref):
    # x_ref    : (N, Cin, tp)  bf16  pillars sit on the 128-lane axis
    # wt_ref   : (Cout, Cin)   bf16  transposed weight with BN scale folded in
    # shift_ref: (Cout, 1)     f32   beta - mean*scale
    # o_ref    : (Cout, tp)    f32   pillar features, lane-dense store
    N = x_ref.shape[0]
    Cout = wt_ref.shape[0]
    tp = x_ref.shape[2]

    wt = wt_ref[...]
    shift = shift_ref[...]
    # Fused Linear -> +shift -> ReLU -> running max.  N is tiny and static, so
    # the loop is fully unrolled; only a (Cout, tp) f32 accumulator is live —
    # no (tp*N, Cout) intermediate ever round-trips through VMEM.
    acc = jnp.zeros((Cout, tp), jnp.float32)       # relu(.) >= 0, so 0-init == max
    for n in range(N):
        y = jnp.dot(wt, x_ref[n], preferred_element_type=jnp.float32)  # (Cout, tp)
        acc = jnp.maximum(acc, jnp.maximum(y + shift, 0.0))
    o_ref[...] = acc.astype(o_ref.dtype)


def _pick_pillar_tile(P, tile_pillars):
    """Tile size: multiple of 128 (lane-dense), divides round_up(P,128) so the
    padding waste is < 128 pillars, and >= 2 grid steps when P allows (v7x)."""
    Pp = _round_up(P, LANE)
    want = 2 if Pp >= 2 * LANE else 1
    cand = min(_round_up(tile_pillars, LANE), Pp)
    tp = LANE
    while cand >= LANE:
        if Pp % cand == 0 and Pp // cand >= want:
            tp = cand
            break
        cand -= LANE
    return Pp, tp


def radar_vfe(pillars, w, gamma, beta, mean, var, eps=1e-3, tile_pillars=512):
    """pillars: (P, N, Cin) f32. Returns (P, Cout) pillar features (f32)."""
    P, N, Cin = pillars.shape
    Cout = w.shape[-1]

    # Fold BatchNorm1d: (x@w)*scale + shift == x@(w*scale) + shift.
    scale = gamma / jnp.sqrt(var + eps)
    wt = (w * scale[None, :]).T.astype(jnp.bfloat16)           # (Cout, Cin)
    shift = (beta - mean * scale).reshape(Cout, 1).astype(jnp.float32)

    Pp, tp = _pick_pillar_tile(P, tile_pillars)
    # Lane-dense layout: pillars on the 128-lane axis; (P,N,Cin) -> (N,Cin,P).
    # Padded (garbage) pillars only pollute their own rows and are sliced off.
    x = jnp.transpose(pillars, (1, 2, 0)).astype(jnp.bfloat16)
    if Pp != P:
        x = jnp.pad(x, ((0, 0), (0, 0), (0, Pp - P)))

    # TODO(synk): add a per-pillar point-validity mask (and the Radar7PillarVFE
    # feature augmentation: offsets from pillar mean/center, extra radar
    # channels) if the caller does not pre-zero invalid points upstream.
    out = pl.pallas_call(
        _radar_pfn_kernel,
        out_shape=jax.ShapeDtypeStruct((Cout, Pp), jnp.float32),
        grid_spec=pltpu.PrefetchScalarGridSpec(
            num_scalar_prefetch=0,
            grid=(Pp // tp,),
            in_specs=[
                pl.BlockSpec((N, Cin, tp), lambda i: (0, 0, i)),
                pl.BlockSpec((Cout, Cin), lambda i: (0, 0)),
                pl.BlockSpec((Cout, 1), lambda i: (0, 0)),
            ],
            out_specs=pl.BlockSpec((Cout, tp), lambda i: (0, i)),
        ),
        compiler_params=pltpu.CompilerParams(
            dimension_semantics=("parallel",),
            vmem_limit_bytes=_vmem_limit_bytes(),
        ),
    )(x, wt, shift)

    # Lane-dense (Cout, Pp) slab -> conventional (P, Cout).  The kernel keeps
    # its stores unmasked (v5e single vst slot); this tiny relayout is left to
    # XLA (or drop it and consume (Cout, P) directly downstream).
    return out[:, :P].T


# ----------------------------------------------------------------------------
# FusionVFE: chain the two VFE modules over the batch dict.
# ----------------------------------------------------------------------------
class FusionVFE:
    def __init__(self, params):
        self.p = params
        # Optional branches from the config are absent in this synthetic setup.
        self.use_image_sampler = False
        self.use_radar_occupancy = False
        self.use_fore_sampler = False
        # TODO(synk): ImageFeatureSampler / RadarOccupancy / ForegroundSampler
        # depend on external sub-module definitions not given in the spec.

    def get_output_feature_dim(self):
        return self.p["img_w"].shape[-1] + self.p["pfn_w"].shape[-1]

    def forward(self, batch_dict):
        # vfe_module_list = [ImageVFE, RadarVFE] — run sequentially.
        batch_dict["image_features"] = image_vfe(
            batch_dict["images"], self.p["img_w"], self.p["img_b"]
        )
        batch_dict["pillar_features"] = radar_vfe(
            batch_dict["radar_pillars"],
            self.p["pfn_w"],
            self.p["pfn_gamma"],
            self.p["pfn_beta"],
            self.p["pfn_mean"],
            self.p["pfn_var"],
        )
        return batch_dict


def _init_params(key, cin_img, cout_img, cin_radar, cout_radar):
    k1, k2, k3 = jax.random.split(key, 3)
    return {
        "img_w": jax.random.normal(k1, (3, 3, cin_img, cout_img), jnp.float32) * 0.1,
        "img_b": jax.random.normal(k2, (cout_img,), jnp.float32) * 0.1,
        "pfn_w": jax.random.normal(k3, (cin_radar, cout_radar), jnp.float32) * 0.1,
        "pfn_gamma": jnp.ones((cout_radar,), jnp.float32),
        "pfn_beta": jnp.zeros((cout_radar,), jnp.float32),
        "pfn_mean": jnp.zeros((cout_radar,), jnp.float32),
        "pfn_var": jnp.ones((cout_radar,), jnp.float32),
    }


if __name__ == "__main__":
    key = jax.random.PRNGKey(0)
    kp, ki, kr = jax.random.split(key, 3)

    # Small, deterministic example shapes.
    B, C_IMG, H, W = 2, 4, 16, 16          # camera images (NCHW like PyTorch)
    P, N_PTS, C_RADAR = 64, 8, 8           # radar pillars
    COUT_IMG, COUT_RADAR = 32, 32

    params = _init_params(kp, C_IMG, COUT_IMG, C_RADAR, COUT_RADAR)
    batch_dict = {
        "images": jax.random.normal(ki, (B, C_IMG, H, W), jnp.float32),
        "radar_pillars": jax.random.normal(kr, (P, N_PTS, C_RADAR), jnp.float32),
    }

    model = FusionVFE(params)
    out = model.forward(batch_dict)
    img_feat = jax.block_until_ready(out["image_features"])
    pil_feat = jax.block_until_ready(out["pillar_features"])

    assert img_feat.shape == (B, H, W, COUT_IMG)
    assert pil_feat.shape == (P, COUT_RADAR)
    assert model.get_output_feature_dim() == COUT_IMG + COUT_RADAR

    # Sanity checks vs. pure-JAX references built from the same bf16-rounded
    # operands the kernels use, so only accumulation order differs.
    xr = jnp.transpose(batch_dict["images"], (0, 2, 3, 1))
    xr = xr.astype(jnp.bfloat16).astype(jnp.float32)
    wr = params["img_w"].astype(jnp.bfloat16).astype(jnp.float32)
    ref_img = lax.conv_general_dilated(
        xr, wr, (1, 1), "SAME", dimension_numbers=("NHWC", "HWIO", "NHWC"),
    ) + params["img_b"]
    ref_img = jnp.maximum(ref_img, 0.0)
    assert jnp.allclose(ref_img, img_feat, atol=2e-3), "image VFE mismatch"

    scale = params["pfn_gamma"] / jnp.sqrt(params["pfn_var"] + 1e-3)
    xb = batch_dict["radar_pillars"].astype(jnp.bfloat16).astype(jnp.float32)
    wb = (params["pfn_w"] * scale[None, :]).astype(jnp.bfloat16).astype(jnp.float32)
    y = jnp.einsum("pnc,cd->pnd", xb, wb) + (
        params["pfn_beta"] - params["pfn_mean"] * scale)
    ref_pil = jnp.max(jnp.maximum(y, 0.0), axis=1)
    assert jnp.allclose(ref_pil, pil_feat, atol=2e-3), "radar VFE mismatch"

    print("KERNEL_OK")
</pallas_src>

<mosaic_0001>
module attributes {stable_mosaic.version = 11 : i64} {
  func.func @_image_vfe_kernel(%arg0: i32, %arg1: i32, %arg2: memref<1x1x10x18x4xbf16, #tpu.memory_space<vmem>>, %arg3: memref<9x4x32xbf16, #tpu.memory_space<vmem>>, %arg4: memref<1x32xf32, #tpu.memory_space<vmem>>, %arg5: memref<1x8x16x32xf32, #tpu.memory_space<vmem>>) attributes {dimension_semantics = [#tpu.dimension_semantics<parallel>, #tpu.dimension_semantics<parallel>], iteration_bounds = array<i64: 2, 2>, scalar_prefetch = 0 : i64, scratch_operands = 0 : i64, tpu.core_type = #tpu.core_type<tc>, window_params = [{transform_indices = @transform_0, window_bounds = array<i64: 1, 1, 10, 18, 4>}, {pipeline_mode = #tpu.pipeline_mode<synchronous>, transform_indices = @transform_1, window_bounds = array<i64: 9, 4, 32>}, {pipeline_mode = #tpu.pipeline_mode<synchronous>, transform_indices = @transform_2, window_bounds = array<i64: 1, 32>}, {transform_indices = @transform_3, window_bounds = array<i64: 1, 8, 16, 32>}]} {
    %c0 = arith.constant 0 : index
    %c0_0 = arith.constant 0 : index
    %c0_1 = arith.constant 0 : index
    %c0_2 = arith.constant 0 : index
    %c0_3 = arith.constant 0 : index
    %0 = vector.load %arg2[%c0, %c0_0, %c0_1, %c0_2, %c0_3] : memref<1x1x10x18x4xbf16, #tpu.memory_space<vmem>>, vector<1x1x10x18x4xbf16>
    %1 = vector.shape_cast %0 : vector<1x1x10x18x4xbf16> to vector<10x18x4xbf16>
    %cst = arith.constant 0.000000e+00 : f32
    %2 = vector.broadcast %cst : f32 to vector<128x32xf32>
    %3 = vector.extract_strided_slice %1 {offsets = [0, 0, 0], sizes = [8, 16, 4], strides = [1, 1, 1]} : vector<10x18x4xbf16> to vector<8x16x4xbf16>
    %4 = vector.shape_cast %3 : vector<8x16x4xbf16> to vector<128x4xbf16>
    %c0_4 = arith.constant 0 : index
    %c0_5 = arith.constant 0 : index
    %c0_6 = arith.constant 0 : index
    %5 = vector.load %arg3[%c0_4, %c0_5, %c0_6] : memref<9x4x32xbf16, #tpu.memory_space<vmem>>, vector<1x4x32xbf16>
    %6 = vector.shape_cast %5 : vector<1x4x32xbf16> to vector<4x32xbf16>
    %cst_7 = arith.constant dense<0.000000e+00> : vector<128x32xf32>
    %7 = tpu.matmul %4, %6, %cst_7 {dimension_numbers = #tpu.dot_dimension_numbers<[1], [0], [0], [1], [0, 0, 1, 1], [], []>} : vector<128x4xbf16>, vector<4x32xbf16>, vector<128x32xf32> -> vector<128x32xf32>
    %8 = arith.addf %2, %7 : vector<128x32xf32>
    %9 = vector.extract_strided_slice %1 {offsets = [0, 1, 0], sizes = [8, 16, 4], strides = [1, 1, 1]} : vector<10x18x4xbf16> to vector<8x16x4xbf16>
    %10 = vector.shape_cast %9 : vector<8x16x4xbf16> to vector<128x4xbf16>
    %c1 = arith.constant 1 : index
    %c0_8 = arith.constant 0 : index
    %c0_9 = arith.constant 0 : index
    %11 = vector.load %arg3[%c1, %c0_8, %c0_9] : memref<9x4x32xbf16, #tpu.memory_space<vmem>>, vector<1x4x32xbf16>
    %12 = vector.shape_cast %11 : vector<1x4x32xbf16> to vector<4x32xbf16>
    %cst_10 = arith.constant dense<0.000000e+00> : vector<128x32xf32>
    %13 = tpu.matmul %10, %12, %cst_10 {dimension_numbers = #tpu.dot_dimension_numbers<[1], [0], [0], [1], [0, 0, 1, 1], [], []>} : vector<128x4xbf16>, vector<4x32xbf16>, vector<128x32xf32> -> vector<128x32xf32>
    %14 = arith.addf %8, %13 : vector<128x32xf32>
    %15 = vector.extract_strided_slice %1 {offsets = [0, 2, 0], sizes = [8, 16, 4], strides = [1, 1, 1]} : vector<10x18x4xbf16> to vector<8x16x4xbf16>
    %16 = vector.shape_cast %15 : vector<8x16x4xbf16> to vector<128x4xbf16>
    %c2 = arith.constant 2 : index
    %c0_11 = arith.constant 0 : index
    %c0_12 = arith.constant 0 : index
    %17 = vector.load %arg3[%c2, %c0_11, %c0_12] : memref<9x4x32xbf16, #tpu.memory_space<vmem>>, vector<1x4x32xbf16>
    %18 = vector.shape_cast %17 : vector<1x4x32xbf16> to vector<4x32xbf16>
    %cst_13 = arith.constant dense<0.000000e+00> : vector<128x32xf32>
    %19 = tpu.matmul %16, %18, %cst_13 {dimension_numbers = #tpu.dot_dimension_numbers<[1], [0], [0], [1], [0, 0, 1, 1], [], []>} : vector<128x4xbf16>, vector<4x32xbf16>, vector<128x32xf32> -> vector<128x32xf32>
    %20 = arith.addf %14, %19 : vector<128x32xf32>
    %21 = vector.extract_strided_slice %1 {offsets = [1, 0, 0], sizes = [8, 16, 4], strides = [1, 1, 1]} : vector<10x18x4xbf16> to vector<8x16x4xbf16>
    %22 = vector.shape_cast %21 : vector<8x16x4xbf16> to vector<128x4xbf16>
    %c3 = arith.constant 3 : index
    %c0_14 = arith.constant 0 : index
    %c0_15 = arith.constant 0 : index
    %23 = vector.load %arg3[%c3, %c0_14, %c0_15] : memref<9x4x32xbf16, #tpu.memory_space<vmem>>, vector<1x4x32xbf16>
    %24 = vector.shape_cast %23 : vector<1x4x32xbf16> to vector<4x32xbf16>
    %cst_16 = arith.constant dense<0.000000e+00> : vector<128x32xf32>
    %25 = tpu.matmul %22, %24, %cst_16 {dimension_numbers = #tpu.dot_dimension_numbers<[1], [0], [0], [1], [0, 0, 1, 1], [], []>} : vector<128x4xbf16>, vector<4x32xbf16>, vector<128x32xf32> -> vector<128x32xf32>
    %26 = arith.addf %20, %25 : vector<128x32xf32>
    %27 = vector.extract_strided_slice %1 {offsets = [1, 1, 0], sizes = [8, 16, 4], strides = [1, 1, 1]} : vector<10x18x4xbf16> to vector<8x16x4xbf16>
    %28 = vector.shape_cast %27 : vector<8x16x4xbf16> to vector<128x4xbf16>
    %c4 = arith.constant 4 : index
    %c0_17 = arith.constant 0 : index
    %c0_18 = arith.constant 0 : index
    %29 = vector.load %arg3[%c4, %c0_17, %c0_18] : memref<9x4x32xbf16, #tpu.memory_space<vmem>>, vector<1x4x32xbf16>
    %30 = vector.shape_cast %29 : vector<1x4x32xbf16> to vector<4x32xbf16>
    %cst_19 = arith.constant dense<0.000000e+00> : vector<128x32xf32>
    %31 = tpu.matmul %28, %30, %cst_19 {dimension_numbers = #tpu.dot_dimension_numbers<[1], [0], [0], [1], [0, 0, 1, 1], [], []>} : vector<128x4xbf16>, vector<4x32xbf16>, vector<128x32xf32> -> vector<128x32xf32>
    %32 = arith.addf %26, %31 : vector<128x32xf32>
    %33 = vector.extract_strided_slice %1 {offsets = [1, 2, 0], sizes = [8, 16, 4], strides = [1, 1, 1]} : vector<10x18x4xbf16> to vector<8x16x4xbf16>
    %34 = vector.shape_cast %33 : vector<8x16x4xbf16> to vector<128x4xbf16>
    %c5 = arith.constant 5 : index
    %c0_20 = arith.constant 0 : index
    %c0_21 = arith.constant 0 : index
    %35 = vector.load %arg3[%c5, %c0_20, %c0_21] : memref<9x4x32xbf16, #tpu.memory_space<vmem>>, vector<1x4x32xbf16>
    %36 = vector.shape_cast %35 : vector<1x4x32xbf16> to vector<4x32xbf16>
    %cst_22 = arith.constant dense<0.000000e+00> : vector<128x32xf32>
    %37 = tpu.matmul %34, %36, %cst_22 {dimension_numbers = #tpu.dot_dimension_numbers<[1], [0], [0], [1], [0, 0, 1, 1], [], []>} : vector<128x4xbf16>, vector<4x32xbf16>, vector<128x32xf32> -> vector<128x32xf32>
    %38 = arith.addf %32, %37 : vector<128x32xf32>
    %39 = vector.extract_strided_slice %1 {offsets = [2, 0, 0], sizes = [8, 16, 4], strides = [1, 1, 1]} : vector<10x18x4xbf16> to vector<8x16x4xbf16>
    %40 = vector.shape_cast %39 : vector<8x16x4xbf16> to vector<128x4xbf16>
    %c6 = arith.constant 6 : index
    %c0_23 = arith.constant 0 : index
    %c0_24 = arith.constant 0 : index
    %41 = vector.load %arg3[%c6, %c0_23, %c0_24] : memref<9x4x32xbf16, #tpu.memory_space<vmem>>, vector<1x4x32xbf16>
    %42 = vector.shape_cast %41 : vector<1x4x32xbf16> to vector<4x32xbf16>
    %cst_25 = arith.constant dense<0.000000e+00> : vector<128x32xf32>
    %43 = tpu.matmul %40, %42, %cst_25 {dimension_numbers = #tpu.dot_dimension_numbers<[1], [0], [0], [1], [0, 0, 1, 1], [], []>} : vector<128x4xbf16>, vector<4x32xbf16>, vector<128x32xf32> -> vector<128x32xf32>
    %44 = arith.addf %38, %43 : vector<128x32xf32>
    %45 = vector.extract_strided_slice %1 {offsets = [2, 1, 0], sizes = [8, 16, 4], strides = [1, 1, 1]} : vector<10x18x4xbf16> to vector<8x16x4xbf16>
    %46 = vector.shape_cast %45 : vector<8x16x4xbf16> to vector<128x4xbf16>
    %c7 = arith.constant 7 : index
    %c0_26 = arith.constant 0 : index
    %c0_27 = arith.constant 0 : index
    %47 = vector.load %arg3[%c7, %c0_26, %c0_27] : memref<9x4x32xbf16, #tpu.memory_space<vmem>>, vector<1x4x32xbf16>
    %48 = vector.shape_cast %47 : vector<1x4x32xbf16> to vector<4x32xbf16>
    %cst_28 = arith.constant dense<0.000000e+00> : vector<128x32xf32>
    %49 = tpu.matmul %46, %48, %cst_28 {dimension_numbers = #tpu.dot_dimension_numbers<[1], [0], [0], [1], [0, 0, 1, 1], [], []>} : vector<128x4xbf16>, vector<4x32xbf16>, vector<128x32xf32> -> vector<128x32xf32>
    %50 = arith.addf %44, %49 : vector<128x32xf32>
    %51 = vector.extract_strided_slice %1 {offsets = [2, 2, 0], sizes = [8, 16, 4], strides = [1, 1, 1]} : vector<10x18x4xbf16> to vector<8x16x4xbf16>
    %52 = vector.shape_cast %51 : vector<8x16x4xbf16> to vector<128x4xbf16>
    %c8 = arith.constant 8 : index
    %c0_29 = arith.constant 0 : index
    %c0_30 = arith.constant 0 : index
    %53 = vector.load %arg3[%c8, %c0_29, %c0_30] : memref<9x4x32xbf16, #tpu.memory_space<vmem>>, vector<1x4x32xbf16>
    %54 = vector.shape_cast %53 : vector<1x4x32xbf16> to vector<4x32xbf16>
    %cst_31 = arith.constant dense<0.000000e+00> : vector<128x32xf32>
    %55 = tpu.matmul %52, %54, %cst_31 {dimension_numbers = #tpu.dot_dimension_numbers<[1], [0], [0], [1], [0, 0, 1, 1], [], []>} : vector<128x4xbf16>, vector<4x32xbf16>, vector<128x32xf32> -> vector<128x32xf32>
    %56 = arith.addf %50, %55 : vector<128x32xf32>
    %c0_32 = arith.constant 0 : index
    %c0_33 = arith.constant 0 : index
    %57 = vector.load %arg4[%c0_32, %c0_33] : memref<1x32xf32, #tpu.memory_space<vmem>>, vector<1x32xf32>
    %58 = vector.broadcast %57 : vector<1x32xf32> to vector<128x32xf32>
    %59 = arith.addf %56, %58 : vector<128x32xf32>
    %cst_34 = arith.constant 0.000000e+00 : f32
    %60 = vector.broadcast %cst_34 : f32 to vector<128x32xf32>
    %61 = arith.maximumf %59, %60 : vector<128x32xf32>
    %62 = vector.shape_cast %61 : vector<128x32xf32> to vector<8x16x32xf32>
    %c0_35 = arith.constant 0 : index
    %c0_36 = arith.constant 0 : index
    %c0_37 = arith.constant 0 : index
    %c0_38 = arith.constant 0 : index
    %63 = vector.load %arg5[%c0_35, %c0_36, %c0_37, %c0_38] : memref<1x8x16x32xf32, #tpu.memory_space<vmem>>, vector<1x8x16x32xf32>
    %64 = vector.shape_cast %63 : vector<1x8x16x32xf32> to vector<8x16x32xf32>
    %65 = vector.shape_cast %62 : vector<8x16x32xf32> to vector<1x8x16x32xf32>
    tpu.vector_store %arg5[%c0_35, %c0_36, %c0_37, %c0_38], %65 {strides = array<i32>} : memref<1x8x16x32xf32, #tpu.memory_space<vmem>>, vector<1x8x16x32xf32>,
    return
  }
  func.func @transform_0(%arg0: i32, %arg1: i32) -> (i32, i32, i32, i32, i32) {
    %c0_i32 = arith.constant 0 : i32
    %c0_i32_0 = arith.constant 0 : i32
    %c0_i32_1 = arith.constant 0 : i32
    %c0_i32_2 = arith.constant 0 : i32
    return %arg0, %arg1, %c0_i32, %c0_i32_0, %c0_i32_1 : i32, i32, i32, i32, i32
  }
  func.func @transform_1(%arg0: i32, %arg1: i32) -> (i32, i32, i32) {
    %c0_i32 = arith.constant 0 : i32
    %c0_i32_0 = arith.constant 0 : i32
    %c0_i32_1 = arith.constant 0 : i32
    %c0_i32_2 = arith.constant 0 : i32
    return %c0_i32, %c0_i32_0, %c0_i32_1 : i32, i32, i32
  }
  func.func @transform_2(%arg0: i32, %arg1: i32) -> (i32, i32) {
    %c0_i32 = arith.constant 0 : i32
    %c0_i32_0 = arith.constant 0 : i32
    %c0_i32_1 = arith.constant 0 : i32
    return %c0_i32, %c0_i32_0 : i32, i32
  }
  func.func @transform_3(%arg0: i32, %arg1: i32) -> (i32, i32, i32, i32) {
    %c0_i32 = arith.constant 0 : i32
    %c0_i32_0 = arith.constant 0 : i32
    %c0_i32_1 = arith.constant 0 : i32
    return %arg0, %arg1, %c0_i32, %c0_i32_0 : i32, i32, i32, i32
  }
}

</mosaic_0001>

<llo_original>
// kernel: tpu_custom_call.1
$region0: #{tpu_custom_call.1}
  #allocation0 [shape = 'u32[]', space=smem, size = 0x4, offset = 0x4, fixed_abs, tag = 'smem constant byte address 0x4 - core index']
  #allocation1 [shape = 'u32[144,128]{1,0:T(1,128)}', space=vmem, size = 0x12000, scoped, tag = 'internal scratch']
  %s0 = inlined_call_operand.vmem [shape: bf16[2,2,10,18,4], index: 0, kind: input, shape index: {}]
  %s1 = inlined_call_operand.vmem [shape: bf16[9,4,32], index: 1, kind: input, shape index: {}]
  %s2 = inlined_call_operand.vmem [shape: f32[1,32], index: 2, kind: input, shape index: {}]
  %s3 = inlined_call_operand.hbm [shape: f32[2,16,16,32], index: 3, kind: output, shape index: {}]
  %s4 = sld [smem:[#allocation0]]
  $region45: #{tpu_custom_call.1} parent=0
    _
  %s6 = ssub.s32 1, %s4
  %s7 = scalar_select 0, %s6, %s4
  $region1: #{tpu_custom_call.1} parent=0
    #allocation2 [shape = 'u8[131072]{0}', space=vmem, size = 0x20000, scoped, tag = 'output window, operand 0']
    #allocation3 [shape = 's32[2]{0}', space=sflag, size = 0x8, scoped, tag = 'scoped memory for tpu_custom_call.1']
    %8 = vsyncpa [#allocation3], 0
    %s9 = scalar_lea.sflag [#allocation3], 1
    %10 = vsyncpa %s9, 0
    loop: start=0, step=1, limit=6
    $region2: #{tpu_custom_call.1} parent=1 // loop_pre_header
      _
    $region3: #{tpu_custom_call.1} parent=1 // loop_header
      %s12 = sphi 0, %s16
      %p13 = scmp.ge.s32.totalorder %s12, 6
      %s19 = sphi 0, %s31
      %s20 = sphi 0, %s27
      %s21 = sphi 0, %s19
      %s22 = sphi 0, %s20
      %s23 = sphi 0, %s21
      %s24 = sphi 0, %s22
      %s36 = sphi 0, %s38
      %s39 = sphi 0, %s36
      %s40 = sphi 0, %s39
      %s56 = sphi 0, %s40
      %s60 = sphi 0, %s60
      %s62 = sphi 0, %s60
      %s63 = sphi 0, %s62
      %s77 = sphi 0, %s63
      %s81 = sphi 0, %s81
      %s83 = sphi 0, %s81
      %s84 = sphi 0, %s83
      %s98 = sphi 0, %s84
      %s106 = sphi 0, %s108
      %s109 = sphi 0, %s106
      %s110 = sphi 0, %s109
      %s126 = sphi 0, %s110
    $region4: #{tpu_custom_call.1} parent=1 // loop_header_branch
      %15 = sbr.rel (%p13) target = $region8
    $region5: #{tpu_custom_call.1} parent=1 // loop_body
      %s17 = ssub.s32 %s12, 1
      %s18 = ssub.s32 %s12, 2
      %s25 = sadd.s32 1, %s20
      %p26 = scmp.ge.s32.totalorder %s25, 2
      %s27 = scalar_select %p26, 0, %s25
      %s28 = sadd.s32 1, %s19
      %s29 = scalar_select %p26, %s28, %s19
      %p30 = scmp.ge.s32.totalorder %s29, 2
      %s31 = scalar_select %p30, 0, %s29
      %s32 = ssub.s32 %s19, %s31
      %s33 = ssub.s32 %s20, %s27
      %s34 = sor.u32 %s32, %s33
      %p35 = scmp.eq.s32.totalorder %s34, 0
      %s37 = sadd.s32 %s36, 1
      %s38 = scalar_select %p35, %s36, %s37
      %p41 = pneg %p35
      %p42 = scmp.eq.s32.totalorder %s12, 3
      %p43 = por %p41, %p42
      %p44 = scmp.ne.s32.totalorder %s36, %s39
      %p45 = scmp.eq.s32.totalorder %s12, 0
      %p46 = por %p44, %p45
      %p47 = scmp.ne.s32.totalorder %s36, %s39
      %p48 = scmp.eq.s32.totalorder %s17, 3
      %p49 = por %p47, %p48
      %p50 = scmp.ne.s32.totalorder %s39, %s40
      %p51 = scmp.eq.s32.totalorder %s17, 0
      %p52 = por %p50, %p51
      %p53 = scmp.ne.s32.totalorder %s39, %s40
      %p54 = scmp.eq.s32.totalorder %s18, 3
      %p55 = por %p53, %p54
      %p57 = scmp.ne.s32.totalorder %s40, %s56
      %p58 = scmp.eq.s32.totalorder %s18, 0
      %p59 = por %p57, %p58
      %s61 = sadd.s32 %s60, 1
      %p64 = scmp.eq.s32.totalorder %s12, 3
      %p65 = scmp.ne.s32.totalorder %s60, %s62
      %p66 = scmp.eq.s32.totalorder %s12, 0
      %p67 = por %p65, %p66
      %p68 = scmp.ne.s32.totalorder %s60, %s62
      %p69 = scmp.eq.s32.totalorder %s17, 3
      %p70 = por %p68, %p69
      %p71 = scmp.ne.s32.totalorder %s62, %s63
      %p72 = scmp.eq.s32.totalorder %s17, 0
      %p73 = por %p71, %p72
      %p74 = scmp.ne.s32.totalorder %s62, %s63
      %p75 = scmp.eq.s32.totalorder %s18, 3
      %p76 = por %p74, %p75
      %p78 = scmp.ne.s32.totalorder %s63, %s77
      %p79 = scmp.eq.s32.totalorder %s18, 0
      %p80 = por %p78, %p79
      %s82 = sadd.s32 %s81, 1
      %p85 = scmp.eq.s32.totalorder %s12, 3
      %p86 = scmp.ne.s32.totalorder %s81, %s83
      %p87 = scmp.eq.s32.totalorder %s12, 0
      %p88 = por %p86, %p87
      %p89 = scmp.ne.s32.totalorder %s81, %s83
      %p90 = scmp.eq.s32.totalorder %s17, 3
      %p91 = por %p89, %p90
      %p92 = scmp.ne.s32.totalorder %s83, %s84
      %p93 = scmp.eq.s32.totalorder %s17, 0
      %p94 = por %p92, %p93
      %p95 = scmp.ne.s32.totalorder %s83, %s84
      %p96 = scmp.eq.s32.totalorder %s18, 3
      %p97 = por %p95, %p96
      %p99 = scmp.ne.s32.totalorder %s84, %s98
      %p100 = scmp.eq.s32.totalorder %s18, 0
      %p101 = por %p99, %p100
      %s102 = ssub.s32 %s19, %s31
      %s103 = ssub.s32 %s20, %s27
      %s104 = sor.u32 %s102, %s103
      %p105 = scmp.eq.s32.totalorder %s104, 0
      %s107 = sadd.s32 %s106, 1
      %s108 = scalar_select %p105, %s106, %s107
      %p111 = pneg %p105
      %p112 = scmp.eq.s32.totalorder %s12, 3
      %p113 = por %p111, %p112
      %p114 = scmp.ne.s32.totalorder %s106, %s109
      %p115 = scmp.eq.s32.totalorder %s12, 0
      %p116 = por %p114, %p115
      %p117 = scmp.ne.s32.totalorder %s106, %s109
      %p118 = scmp.eq.s32.totalorder %s17, 3
      %p119 = por %p117, %p118
      %p120 = scmp.ne.s32.totalorder %s109, %s110
      %p121 = scmp.eq.s32.totalorder %s17, 0
      %p122 = por %p120, %p121
      %p123 = scmp.ne.s32.totalorder %s109, %s110
      %p124 = scmp.eq.s32.totalorder %s18, 3
      %p125 = por %p123, %p124
      %p127 = scmp.ne.s32.totalorder %s110, %s126
      %p128 = scmp.eq.s32.totalorder %s18, 0
      %p129 = por %p127, %p128
      %p130 = scmp.le.s32.totalorder 1, %s12
      %p131 = scmp.lt.s32.totalorder %s12, 5
      %p132 = pnand %p130, %p131
      %p133 = pneg %p132
      // Predicated region
      $region9: #{tpu_custom_call.1} parent=5 // pred_check
        _
      $region10: #{tpu_custom_call.1} parent=5 // pred_check_branch
        %135 = sbr.rel (%p132) target = $region12
      $region11: #{tpu_custom_call.1} parent=5 // pred_region
        %s136 = ssub.s32 %s12, 1
        // Predicated region
        $region13: #{tpu_custom_call.1} parent=11 // pred_check
          %p137 = pneg %p73
        $region14: #{tpu_custom_call.1} parent=11 // pred_check_branch
          %139 = sbr.rel (%p137) target = $region16
        $region15: #{tpu_custom_call.1} parent=11 // pred_region
          _
        $region16: #{tpu_custom_call.1} parent=11 // pred_fallthru
          _
        // Predicated region
        $region17: #{tpu_custom_call.1} parent=11 // pred_check
          %p140 = pneg %p94
        $region18: #{tpu_custom_call.1} parent=11 // pred_check_branch
          %142 = sbr.rel (%p140) target = $region20
        $region19: #{tpu_custom_call.1} parent=11 // pred_region
          _
        $region20: #{tpu_custom_call.1} parent=11 // pred_fallthru
          _
      $region12: #{tpu_custom_call.1} parent=5 // pred_fallthru
        _
      %p143 = scmp.lt.s32.totalorder %s12, 4
      // Predicated region
      $region21: #{tpu_custom_call.1} parent=5 // pred_check
        %p144 = pneg %p143
      $region22: #{tpu_custom_call.1} parent=5 // pred_check_branch
        %146 = sbr.rel (%p144) target = $region24
      $region23: #{tpu_custom_call.1} parent=5 // pred_region
        // Predicated region
        $region25: #{tpu_custom_call.1} parent=23 // pred_check
          %p147 = pneg %p46
        $region26: #{tpu_custom_call.1} parent=23 // pred_check_branch
          %149 = sbr.rel (%p147) target = $region28
        $region27: #{tpu_custom_call.1} parent=23 // pred_region
          %p150 = scmp.lt.s32.totalorder %s19, 1
          %s151 = scalar_select %p150, %s19, 1
          %p152 = scmp.lt.s32.totalorder %s20, 1
          %s153 = scalar_select %p152, %s20, 1
          %s154 = smul.addr %s153, 30
          %s155 = smul.addr %s151, 60
          %s156 = sadd.s32 %s154, %s155
          %s157 = smul.addr %s156, 4
          %s158 = scalar_lea.vmem %s0, %s157
        $region28: #{tpu_custom_call.1} parent=23 // pred_fallthru
          _
      $region24: #{tpu_custom_call.1} parent=5 // pred_fallthru
        _
      %p159 = scmp.le.s32.totalorder 1, %s12
      %p160 = scmp.lt.s32.totalorder %s12, 5
      %p161 = pnand %p159, %p160
      %p162 = pneg %p161
      // Predicated region
      $region29: #{tpu_custom_call.1} parent=5 // pred_check
        _
      $region30: #{tpu_custom_call.1} parent=5 // pred_check_branch
        %164 = sbr.rel (%p161) target = $region32
      $region31: #{tpu_custom_call.1} parent=5 // pred_region
        %s165 = ssub.s32 %s12, 1
        %p166 = scmp.lt.s32.totalorder %s21, 1
        %s167 = scalar_select %p166, %s21, 1
        %p168 = scmp.lt.s32.totalorder %s22, 1
        %s169 = scalar_select %p168, %s22, 1
        %s170 = smul.addr %s169, 30
        %s171 = smul.addr %s167, 60
        %s172 = sadd.s32 %s170, %s171
        %s173 = smul.addr %s172, 4
        %s174 = scalar_lea.vmem %s0, %s173
        %p175 = pneg %p52
        %p176 = pneg %p49
        %p177 = pneg %p73
        %p178 = pneg %p70
        %p179 = pneg %p94
        %p180 = pneg %p91
        %p181 = pneg %p122
        %p182 = pneg %p119
        %s183 = sand.u32 %s109, 1
        %s184 = scalar_lea.sflag [#allocation3], %s183
        %s185 = sand.u32 %s109, 1
        %s186 = smul.addr %s185, 128
        %s187 = scalar_lea.vmem [#allocation2], %s186
        %p188 = scmp.lt.s32.totalorder %s21, 1
        %s189 = scalar_select %p188, %s21, 1
        %p190 = scmp.lt.s32.totalorder %s22, 1
        %s191 = scalar_select %p190, %s22, 1
        %s192 = smul.addr %s191, 30
        %s193 = smul.addr %s189, 60
        %s194 = sadd.s32 %s192, %s193
        %s195 = smul.addr %s194, 4
        %s196 = scalar_lea.vmem %s0, %s195
        %s197 = smul.u32 8, %s22
        %v199 = vld [vmem:[%s196] sm:$0xf]
        %v200 = vld [vmem:[%s196 + $0x4] sm:$0xf]
        %v201 = vld [vmem:[%s196 + $0x8] sm:$0x1]
        %v202 = vld [vmem:[%s196 + $0xc] sm:$0xf]
        %v203 = vld [vmem:[%s196 + $0x10] sm:$0xf]
        %v204 = vld [vmem:[%s196 + $0x14] sm:$0x1]
        %v205 = vld [vmem:[%s196 + $0x18] sm:$0xf]
        %v206 = vld [vmem:[%s196 + $0x1c] sm:$0xf]
        %v207 = vld [vmem:[%s196 + $0x20] sm:$0x1]
        %v208 = vld [vmem:[%s196 + $0x24] sm:$0xf]
        %v209 = vld [vmem:[%s196 + $0x28] sm:$0xf]
        %v210 = vld [vmem:[%s196 + $0x2c] sm:$0x1]
        %v211 = vld [vmem:[%s196 + $0x30] sm:$0xf]
        %v212 = vld [vmem:[%s196 + $0x34] sm:$0xf]
        %v213 = vld [vmem:[%s196 + $0x38] sm:$0x1]
        %v214 = vld [vmem:[%s196 + $0x3c] sm:$0xf]
        %v215 = vld [vmem:[%s196 + $0x40] sm:$0xf]
        %v216 = vld [vmem:[%s196 + $0x44] sm:$0x1]
        %v217 = vld [vmem:[%s196 + $0x48] sm:$0xf]
        %v218 = vld [vmem:[%s196 + $0x4c] sm:$0xf]
        %v219 = vld [vmem:[%s196 + $0x50] sm:$0x1]
        %v220 = vld [vmem:[%s196 + $0x54] sm:$0xf]
        %v221 = vld [vmem:[%s196 + $0x58] sm:$0xf]
        %v222 = vld [vmem:[%s196 + $0x5c] sm:$0x1]
        %v223 = vld [vmem:[%s196 + $0x60] sm:$0xf]
        %v224 = vld [vmem:[%s196 + $0x64] sm:$0xf]
        %v225 = vld [vmem:[%s196 + $0x68] sm:$0x1]
        %v226 = vld [vmem:[%s196 + $0x6c] sm:$0xf]
        %v227 = vld [vmem:[%s196 + $0x70] sm:$0xf]
        %v228 = vld [vmem:[%s196 + $0x74] sm:$0x1]
        %v229 = vld [vmem:[%s1] sm:$0x3]
        %vm230 = vsmask.f32 3328
        %vm231 = vsmask.f32 7440
        %vm232 = vmor %vm230, %vm231
        %v234 = vshrl.u32 %v199, 16
        %v236 = vrot.slane %v234, 4
        %v237 = vshll.u32 %v199, 16
        %v239 = vrot.slane %v237, 5
        %v240 = vor.u32 %v236, %v239
        %v241 = vrot.slane %v240, 4
        %v243 = vshll.u32 %v200, 16
        %v245 = vrot.slane %v243, 5
        %v246 = vsel %vm232, %v241, %v245
        %v247 = vshrl.u32 %v200, 16
        %v249 = vrot.slane %v247, 4
        %v250 = vor.u32 %v249, %v245
        %v251 = vrot.slane %v250, 4
        %v253 = vshll.u32 %v201, 16
        %v255 = vrot.slane %v253, 5
        %v256 = vsel %vm232, %v251, %v255
        %v258 = vshrl.u32 %v202, 16
        %v260 = vrot.slane %v258, 4
        %v261 = vshll.u32 %v202, 16
        %v263 = vrot.slane %v261, 5
        %v264 = vor.u32 %v260, %v263
        %v265 = vrot.slane %v264, 4
        %v267 = vshll.u32 %v203, 16
        %v269 = vrot.slane %v267, 5
        %v270 = vsel %vm232, %v265, %v269
        %v271 = vshrl.u32 %v203, 16
        %v273 = vrot.slane %v271, 4
        %v274 = vor.u32 %v273, %v269
        %v275 = vrot.slane %v274, 4
        %v277 = vshll.u32 %v204, 16
        %v279 = vrot.slane %v277, 5
        %v280 = vsel %vm232, %v275, %v279
        %v282 = vshrl.u32 %v205, 16
        %v284 = vrot.slane %v282, 4
        %v285 = vshll.u32 %v205, 16
        %v287 = vrot.slane %v285, 5
        %v288 = vor.u32 %v284, %v287
        %v289 = vrot.slane %v288, 4
        %v291 = vshll.u32 %v206, 16
        %v293 = vrot.slane %v291, 5
        %v294 = vsel %vm232, %v289, %v293
        %v295 = vshrl.u32 %v206, 16
        %v297 = vrot.slane %v295, 4
        %v298 = vor.u32 %v297, %v293
        %v299 = vrot.slane %v298, 4
        %v301 = vshll.u32 %v207, 16
        %v303 = vrot.slane %v301, 5
        %v304 = vsel %vm232, %v299, %v303
        %v306 = vshrl.u32 %v208, 16
        %v308 = vrot.slane %v306, 4
        %v309 = vshll.u32 %v208, 16
        %v311 = vrot.slane %v309, 5
        %v312 = vor.u32 %v308, %v311
        %v313 = vrot.slane %v312, 4
        %v315 = vshll.u32 %v209, 16
        %v317 = vrot.slane %v315, 5
        %v318 = vsel %vm232, %v313, %v317
        %v319 = vshrl.u32 %v209, 16
        %v321 = vrot.slane %v319, 4
        %v322 = vor.u32 %v321, %v317
        %v323 = vrot.slane %v322, 4
        %v325 = vshll.u32 %v210, 16
        %v327 = vrot.slane %v325, 5
        %v328 = vsel %vm232, %v323, %v327
        %v330 = vshrl.u32 %v211, 16
        %v332 = vrot.slane %v330, 4
        %v333 = vshll.u32 %v211, 16
        %v335 = vrot.slane %v333, 5
        %v336 = vor.u32 %v332, %v335
        %v337 = vrot.slane %v336, 4
        %v339 = vshll.u32 %v212, 16
        %v341 = vrot.slane %v339, 5
        %v342 = vsel %vm232, %v337, %v341
        %v343 = vshrl.u32 %v212, 16
        %v345 = vrot.slane %v343, 4
        %v346 = vor.u32 %v345, %v341
        %v347 = vrot.slane %v346, 4
        %v349 = vshll.u32 %v213, 16
        %v351 = vrot.slane %v349, 5
        %v352 = vsel %vm232, %v347, %v351
        %v354 = vshrl.u32 %v214, 16
        %v356 = vrot.slane %v354, 4
        %v357 = vshll.u32 %v214, 16
        %v359 = vrot.slane %v357, 5
        %v360 = vor.u32 %v356, %v359
        %v361 = vrot.slane %v360, 4
        %v363 = vshll.u32 %v215, 16
        %v365 = vrot.slane %v363, 5
        %v366 = vsel %vm232, %v361, %v365
        %v367 = vshrl.u32 %v215, 16
        %v369 = vrot.slane %v367, 4
        %v370 = vor.u32 %v369, %v365
        %v371 = vrot.slane %v370, 4
        %v373 = vshll.u32 %v216, 16
        %v375 = vrot.slane %v373, 5
        %v376 = vsel %vm232, %v371, %v375
        %v378 = vshrl.u32 %v217, 16
        %v380 = vrot.slane %v378, 4
        %v381 = vshll.u32 %v217, 16
        %v383 = vrot.slane %v381, 5
        %v384 = vor.u32 %v380, %v383
        %v385 = vrot.slane %v384, 4
        %v387 = vshll.u32 %v218, 16
        %v389 = vrot.slane %v387, 5
        %v390 = vsel %vm232, %v385, %v389
        %v391 = vshrl.u32 %v218, 16
        %v393 = vrot.slane %v391, 4
        %v394 = vor.u32 %v393, %v389
        %v395 = vrot.slane %v394, 4
        %v397 = vshll.u32 %v219, 16
        %v399 = vrot.slane %v397, 5
        %v400 = vsel %vm232, %v395, %v399
        %v402 = vshrl.u32 %v220, 16
        %v404 = vrot.slane %v402, 4
        %v405 = vshll.u32 %v220, 16
        %v407 = vrot.slane %v405, 5
        %v408 = vor.u32 %v404, %v407
        %v409 = vrot.slane %v408, 4
        %v411 = vshll.u32 %v221, 16
        %v413 = vrot.slane %v411, 5
        %v414 = vsel %vm232, %v409, %v413
        %v415 = vshrl.u32 %v221, 16
        %v417 = vrot.slane %v415, 4
        %v418 = vor.u32 %v417, %v413
        %v419 = vrot.slane %v418, 4
        %v421 = vshll.u32 %v222, 16
        %v423 = vrot.slane %v421, 5
        %v424 = vsel %vm232, %v419, %v423
        %s425 = scalar_lea.vmem %s1, 2
        %v426 = vld [vmem:[%s425] sm:$0x3]
        %v427 = vunpack.c.l.b16 %v246
        %v428 = vunpack.c.l.b16 %v256
        %v429 = vunpack.c.l.b16 %v270
        %v430 = vunpack.c.l.b16 %v280
        %v431 = vunpack.c.l.b16 %v294
        %v432 = vunpack.c.l.b16 %v304
        %v433 = vunpack.c.l.b16 %v318
        %v434 = vunpack.c.l.b16 %v328
        %v435 = vunpack.c.l.b16 %v342
        %v436 = vunpack.c.l.b16 %v352
        %v437 = vunpack.c.l.b16 %v366
        %v438 = vunpack.c.l.b16 %v376
        %v439 = vunpack.c.l.b16 %v390
        %v440 = vunpack.c.l.b16 %v400
        %v441 = vunpack.c.l.b16 %v414
        %v442 = vunpack.c.l.b16 %v424
        %v443 = vpack.c.b16 %v428, %v427
        %v444 = vpack.c.b16 %v430, %v429
        %v445 = vpack.c.b16 %v432, %v431
        %v446 = vpack.c.b16 %v434, %v433
        %v447 = vpack.c.b16 %v436, %v435
        %v448 = vpack.c.b16 %v438, %v437
        %v449 = vpack.c.b16 %v440, %v439
        %v450 = vpack.c.b16 %v442, %v441
        %vm451 = vcmask 31744
        %v453 = vsel %vm451, %v443, 0
        %v456 = vsel %vm451, %v444, 0
        %v459 = vsel %vm451, %v445, 0
        %v462 = vsel %vm451, %v446, 0
        %v465 = vsel %vm451, %v447, 0
        %v468 = vsel %vm451, %v448, 0
        %v471 = vsel %vm451, %v449, 0
        %v474 = vsel %vm451, %v450, 0
        %vm476 = vcmask 1041408
        %v478 = vsel %vm476, %v426, 0
        %480 = vmatprep.subr.bf16.mxu0 0
        %481 = vmatpush1.bf16.msra.mxu0 %v478
        %482 = vmatprep.subr.bf16.mxu0 0
        %483 = vmatpush1.bf16.msra.mxu0 0
        %484 = vmatprep.subr.bf16.mxu0 0
        %485 = vmatpush1.bf16.msra.mxu0 0
        %486 = vmatprep.subr.bf16.mxu0 0
        %487 = vmatpush1.bf16.msra.mxu0 0
        %488 = vmatprep.subr.bf16.mxu0 0
        %489 = vmatpush1.bf16.msra.mxu0 0
        %490 = vmatprep.subr.bf16.mxu0 0
        %491 = vmatpush1.bf16.msra.mxu0 0
        %492 = vmatprep.subr.bf16.mxu0 0
        %493 = vmatpush1.bf16.msra.mxu0 0
        %494 = vmatprep.subr.bf16.mxu0 0
        %495 = vmatpush1.bf16.msra.mxu0 0
        %496 = vmatprep.subr.bf16.mxu0 0
        %497 = vmatpush1.bf16.msra.mxu0 0
        %498 = vmatprep.subr.bf16.mxu0 0
        %499 = vmatpush1.bf16.msra.mxu0 0
        %500 = vmatprep.subr.bf16.mxu0 0
        %501 = vmatpush1.bf16.msra.mxu0 0
        %502 = vmatprep.subr.bf16.mxu0 0
        %503 = vmatpush1.bf16.msra.mxu0 0
        %504 = vmatprep.subr.bf16.mxu0 0
        %505 = vmatpush1.bf16.msra.mxu0 0
        %506 = vmatprep.subr.bf16.mxu0 0
        %507 = vmatpush1.bf16.msra.mxu0 0
        %508 = vmatprep.subr.bf16.mxu0 0
        %509 = vmatpush1.bf16.msra.mxu0 0
        %510 = vmatprep.subr.bf16.mxu0 0
        %511 = vmatpush1.bf16.msra.mxu0 0
        %512 = vmatprep.mubr.bf16.mxu0 0
        %513 = vmatmul.mubr.bf16.gmra.mrb[0].mxu0 %v453
        %v514 = vpop.f32.mrb[0].mxu0
        %v515 = vadd.f32 0.0, %v514
        %v516 = vpop.f32.mrb[0].mxu0
        %v517 = vpop.f32.mrb[0].mxu0
        %v518 = vadd.f32 0.0, %v517
        %v519 = vpop.f32.mrb[0].mxu0
        %520 = vmatprep.mubr.bf16.mxu0 0
        %521 = vmatmul.mubr.bf16.gmra.mrb[0].mxu0 %v456
        %v522 = vpop.f32.mrb[0].mxu0
        %v523 = vadd.f32 0.0, %v522
        %v524 = vpop.f32.mrb[0].mxu0
        %v525 = vpop.f32.mrb[0].mxu0
        %v526 = vadd.f32 0.0, %v525
        %v527 = vpop.f32.mrb[0].mxu0
        %528 = vmatprep.mubr.bf16.mxu0 0
        %529 = vmatmul.mubr.bf16.gmra.mrb[0].mxu0 %v459
        %v530 = vpop.f32.mrb[0].mxu0
        %v531 = vadd.f32 0.0, %v530
        %v532 = vpop.f32.mrb[0].mxu0
        %v533 = vpop.f32.mrb[0].mxu0
        %v534 = vadd.f32 0.0, %v533
        %v535 = vpop.f32.mrb[0].mxu0
        %536 = vmatprep.mubr.bf16.mxu0 0
        %537 = vmatmul.mubr.bf16.gmra.mrb[0].mxu0 %v462
        %v538 = vpop.f32.mrb[0].mxu0
        %v539 = vadd.f32 0.0, %v538
        %v540 = vpop.f32.mrb[0].mxu0
        %v541 = vpop.f32.mrb[0].mxu0
        %v542 = vadd.f32 0.0, %v541
        %v543 = vpop.f32.mrb[0].mxu0
        %544 = vmatprep.mubr.bf16.mxu0 0
        %545 = vmatmul.mubr.bf16.gmra.mrb[0].mxu0 %v465
        %v546 = vpop.f32.mrb[0].mxu0
        %v547 = vadd.f32 0.0, %v546
        %v548 = vpop.f32.mrb[0].mxu0
        %v549 = vpop.f32.mrb[0].mxu0
        %v550 = vadd.f32 0.0, %v549
        %v551 = vpop.f32.mrb[0].mxu0
        %552 = vmatprep.mubr.bf16.mxu0 0
        %553 = vmatmul.mubr.bf16.gmra.mrb[0].mxu0 %v468
        %v554 = vpop.f32.mrb[0].mxu0
        %v555 = vadd.f32 0.0, %v554
        %v556 = vpop.f32.mrb[0].mxu0
        %v557 = vpop.f32.mrb[0].mxu0
        %v558 = vadd.f32 0.0, %v557
        %v559 = vpop.f32.mrb[0].mxu0
        %560 = vmatprep.mubr.bf16.mxu0 0
        %561 = vmatmul.mubr.bf16.gmra.mrb[0].mxu0 %v471
        %v562 = vpop.f32.mrb[0].mxu0
        %v563 = vadd.f32 0.0, %v562
        %v564 = vpop.f32.mrb[0].mxu0
        %v565 = vpop.f32.mrb[0].mxu0
        %v566 = vadd.f32 0.0, %v565
        %v567 = vpop.f32.mrb[0].mxu0
        %568 = vmatprep.mubr.bf16.mxu0 0
        %569 = vmatmul.mubr.bf16.gmra.mrb[0].mxu0 %v474
        %v570 = vpop.f32.mrb[0].mxu0
        %v571 = vadd.f32 0.0, %v570
        %v572 = vpop.f32.mrb[0].mxu0
        %v573 = vpop.f32.mrb[0].mxu0
        %v574 = vadd.f32 0.0, %v573
        %v575 = vpop.f32.mrb[0].mxu0
        %576 = vdwg.mxu0
        %v593 = vunpack.c.l.b16 %v199
        %v594 = vunpack.c.l.b16 %v200
        %v595 = vunpack.c.l.b16 %v202
        %v596 = vunpack.c.l.b16 %v203
        %v597 = vunpack.c.l.b16 %v205
        %v598 = vunpack.c.l.b16 %v206
        %v599 = vunpack.c.l.b16 %v208
        %v600 = vunpack.c.l.b16 %v209
        %v601 = vunpack.c.l.b16 %v211
        %v602 = vunpack.c.l.b16 %v212
        %v603 = vunpack.c.l.b16 %v214
        %v604 = vunpack.c.l.b16 %v215
        %v605 = vunpack.c.l.b16 %v217
        %v606 = vunpack.c.l.b16 %v218
        %v607 = vunpack.c.l.b16 %v220
        %v608 = vunpack.c.l.b16 %v221
        %v609 = vpack.c.b16 %v594, %v593
        %v610 = vpack.c.b16 %v596, %v595
        %v611 = vpack.c.b16 %v598, %v597
        %v612 = vpack.c.b16 %v600, %v599
        %v613 = vpack.c.b16 %v602, %v601
        %v614 = vpack.c.b16 %v604, %v603
        %v615 = vpack.c.b16 %v606, %v605
        %v616 = vpack.c.b16 %v608, %v607
        %v618 = vsel %vm451, %v609, 0
        %v621 = vsel %vm451, %v610, 0
        %v624 = vsel %vm451, %v611, 0
        %v627 = vsel %vm451, %v612, 0
        %v630 = vsel %vm451, %v613, 0
        %v633 = vsel %vm451, %v614, 0
        %v636 = vsel %vm451, %v615, 0
        %v639 = vsel %vm451, %v616, 0
        %v642 = vsel %vm476, %v229, 0
        %644 = vmatprep.subr.bf16.mxu0 0
        %645 = vmatpush1.bf16.msra.mxu0 %v642
        %646 = vmatprep.subr.bf16.mxu0 0
        %647 = vmatpush1.bf16.msra.mxu0 0
        %648 = vmatprep.subr.bf16.mxu0 0
        %649 = vmatpush1.bf16.msra.mxu0 0
        %650 = vmatprep.subr.bf16.mxu0 0
        %651 = vmatpush1.bf16.msra.mxu0 0
        %652 = vmatprep.subr.bf16.mxu0 0
        %653 = vmatpush1.bf16.msra.mxu0 0
        %654 = vmatprep.subr.bf16.mxu0 0
        %655 = vmatpush1.bf16.msra.mxu0 0
        %656 = vmatprep.subr.bf16.mxu0 0
        %657 = vmatpush1.bf16.msra.mxu0 0
        %658 = vmatprep.subr.bf16.mxu0 0
        %659 = vmatpush1.bf16.msra.mxu0 0
        %660 = vmatprep.subr.bf16.mxu0 0
        %661 = vmatpush1.bf16.msra.mxu0 0
        %662 = vmatprep.subr.bf16.mxu0 0
        %663 = vmatpush1.bf16.msra.mxu0 0
        %664 = vmatprep.subr.bf16.mxu0 0
        %665 = vmatpush1.bf16.msra.mxu0 0
        %666 = vmatprep.subr.bf16.mxu0 0
        %667 = vmatpush1.bf16.msra.mxu0 0
        %668 = vmatprep.subr.bf16.mxu0 0
        %669 = vmatpush1.bf16.msra.mxu0 0
        %670 = vmatprep.subr.bf16.mxu0 0
        %671 = vmatpush1.bf16.msra.mxu0 0
        %672 = vmatprep.subr.bf16.mxu0 0
        %673 = vmatpush1.bf16.msra.mxu0 0
        %674 = vmatprep.subr.bf16.mxu0 0
        %675 = vmatpush1.bf16.msra.mxu0 0
        %676 = vmatprep.mubr.bf16.mxu0 0
        %677 = vmatmul.mubr.bf16.gmra.mrb[0].mxu0 %v618
        %v678 = vpop.f32.mrb[0].mxu0
        %v679 = vadd.f32 %v515, %v678
        %v680 = vpop.f32.mrb[0].mxu0
        %v681 = vpop.f32.mrb[0].mxu0
        %v682 = vadd.f32 %v518, %v681
        %v683 = vpop.f32.mrb[0].mxu0
        %684 = vmatprep.mubr.bf16.mxu0 0
        %685 = vmatmul.mubr.bf16.gmra.mrb[0].mxu0 %v621
        %v686 = vpop.f32.mrb[0].mxu0
        %v687 = vadd.f32 %v523, %v686
        %v688 = vpop.f32.mrb[0].mxu0
        %v689 = vpop.f32.mrb[0].mxu0
        %v690 = vadd.f32 %v526, %v689
        %v691 = vpop.f32.mrb[0].mxu0
        %692 = vmatprep.mubr.bf16.mxu0 0
        %693 = vmatmul.mubr.bf16.gmra.mrb[0].mxu0 %v624
        %v694 = vpop.f32.mrb[0].mxu0
        %v695 = vadd.f32 %v531, %v694
        %v696 = vpop.f32.mrb[0].mxu0
        %v697 = vpop.f32.mrb[0].mxu0
        %v698 = vadd.f32 %v534, %v697
        %v699 = vpop.f32.mrb[0].mxu0
        %700 = vmatprep.mubr.bf16.mxu0 0
        %701 = vmatmul.mubr.bf16.gmra.mrb[0].mxu0 %v627
        %v702 = vpop.f32.mrb[0].mxu0
        %v703 = vadd.f32 %v539, %v702
        %v704 = vpop.f32.mrb[0].mxu0
        %v705 = vpop.f32.mrb[0].mxu0
        %v706 = vadd.f32 %v542, %v705
        %v707 = vpop.f32.mrb[0].mxu0
        %708 = vmatprep.mubr.bf16.mxu0 0
        %709 = vmatmul.mubr.bf16.gmra.mrb[0].mxu0 %v630
        %v710 = vpop.f32.mrb[0].mxu0
        %v711 = vadd.f32 %v547, %v710
        %v712 = vpop.f32.mrb[0].mxu0
        %v713 = vpop.f32.mrb[0].mxu0
        %v714 = vadd.f32 %v550, %v713
        %v715 = vpop.f32.mrb[0].mxu0
        %716 = vmatprep.mubr.bf16.mxu0 0
        %717 = vmatmul.mubr.bf16.gmra.mrb[0].mxu0 %v633
        %v718 = vpop.f32.mrb[0].mxu0
        %v719 = vadd.f32 %v555, %v718
        %v720 = vpop.f32.mrb[0].mxu0
        %v721 = vpop.f32.mrb[0].mxu0
        %v722 = vadd.f32 %v558, %v721
        %v723 = vpop.f32.mrb[0].mxu0
        %724 = vmatprep.mubr.bf16.mxu0 0
        %725 = vmatmul.mubr.bf16.gmra.mrb[0].mxu0 %v636
        %v726 = vpop.f32.mrb[0].mxu0
        %v727 = vadd.f32 %v563, %v726
        %v728 = vpop.f32.mrb[0].mxu0
        %v729 = vpop.f32.mrb[0].mxu0
        %v730 = vadd.f32 %v566, %v729
        %v731 = vpop.f32.mrb[0].mxu0
        %732 = vmatprep.mubr.bf16.mxu0 0
        %733 = vmatmul.mubr.bf16.gmra.mrb[0].mxu0 %v639
        %v734 = vpop.f32.mrb[0].mxu0
        %v735 = vadd.f32 %v571, %v734
        %v736 = vpop.f32.mrb[0].mxu0
        %v737 = vpop.f32.mrb[0].mxu0
        %v738 = vadd.f32 %v574, %v737
        %v739 = vpop.f32.mrb[0].mxu0
        %740 = vdwg.mxu0
        %vm749 = vcmask 1042432
        %vm750 = vcmask 1046532
        %vm751 = vmor %vm749, %vm750
        %v752 = vrot.slane %v199, 5
        %v753 = vrot.slane %v752, 4
        %v754 = vrot.slane %v200, 5
        %v755 = vsel %vm751, %v753, %v754
        %v756 = vrot.slane %v754, 4
        %v757 = vrot.slane %v201, 5
        %v758 = vsel %vm751, %v756, %v757
        %v759 = vrot.slane %v202, 5
        %v760 = vrot.slane %v759, 4
        %v761 = vrot.slane %v203, 5
        %v762 = vsel %vm751, %v760, %v761
        %v763 = vrot.slane %v761, 4
        %v764 = vrot.slane %v204, 5
        %v765 = vsel %vm751, %v763, %v764
        %v766 = vrot.slane %v205, 5
        %v767 = vrot.slane %v766, 4
        %v768 = vrot.slane %v206, 5
        %v769 = vsel %vm751, %v767, %v768
        %v770 = vrot.slane %v768, 4
        %v771 = vrot.slane %v207, 5
        %v772 = vsel %vm751, %v770, %v771
        %v773 = vrot.slane %v208, 5
        %v774 = vrot.slane %v773, 4
        %v775 = vrot.slane %v209, 5
        %v776 = vsel %vm751, %v774, %v775
        %v777 = vrot.slane %v775, 4
        %v778 = vrot.slane %v210, 5
        %v779 = vsel %vm751, %v777, %v778
        %v780 = vrot.slane %v211, 5
        %v781 = vrot.slane %v780, 4
        %v782 = vrot.slane %v212, 5
        %v783 = vsel %vm751, %v781, %v782
        %v784 = vrot.slane %v782, 4
        %v785 = vrot.slane %v213, 5
        %v786 = vsel %vm751, %v784, %v785
        %v787 = vrot.slane %v214, 5
        %v788 = vrot.slane %v787, 4
        %v789 = vrot.slane %v215, 5
        %v790 = vsel %vm751, %v788, %v789
        %v791 = vrot.slane %v789, 4
        %v792 = vrot.slane %v216, 5
        %v793 = vsel %vm751, %v791, %v792
        %v794 = vrot.slane %v217, 5
        %v795 = vrot.slane %v794, 4
        %v796 = vrot.slane %v218, 5
        %v797 = vsel %vm751, %v795, %v796
        %v798 = vrot.slane %v796, 4
        %v799 = vrot.slane %v219, 5
        %v800 = vsel %vm751, %v798, %v799
        %v801 = vrot.slane %v220, 5
        %v802 = vrot.slane %v801, 4
        %v803 = vrot.slane %v221, 5
        %v804 = vsel %vm751, %v802, %v803
        %v805 = vrot.slane %v803, 4
        %v806 = vrot.slane %v222, 5
        %v807 = vsel %vm751, %v805, %v806
        %s808 = scalar_lea.vmem %s1, 4
        %v809 = vld [vmem:[%s808] sm:$0x3]
        %v810 = vunpack.c.l.b16 %v755
        %v811 = vunpack.c.l.b16 %v758
        %v812 = vunpack.c.l.b16 %v762
        %v813 = vunpack.c.l.b16 %v765
        %v814 = vunpack.c.l.b16 %v769
        %v815 = vunpack.c.l.b16 %v772
        %v816 = vunpack.c.l.b16 %v776
        %v817 = vunpack.c.l.b16 %v779
        %v818 = vunpack.c.l.b16 %v783
        %v819 = vunpack.c.l.b16 %v786
        %v820 = vunpack.c.l.b16 %v790
        %v821 = vunpack.c.l.b16 %v793
        %v822 = vunpack.c.l.b16 %v797
        %v823 = vunpack.c.l.b16 %v800
        %v824 = vunpack.c.l.b16 %v804
        %v825 = vunpack.c.l.b16 %v807
        %v826 = vpack.c.b16 %v811, %v810
        %v827 = vpack.c.b16 %v813, %v812
        %v828 = vpack.c.b16 %v815, %v814
        %v829 = vpack.c.b16 %v817, %v816
        %v830 = vpack.c.b16 %v819, %v818
        %v831 = vpack.c.b16 %v821, %v820
        %v832 = vpack.c.b16 %v823, %v822
        %v833 = vpack.c.b16 %v825, %v824
        %v835 = vsel %vm451, %v826, 0
        %v838 = vsel %vm451, %v827, 0
        %v841 = vsel %vm451, %v828, 0
        %v844 = vsel %vm451, %v829, 0
        %v847 = vsel %vm451, %v830, 0
        %v850 = vsel %vm451, %v831, 0
        %v853 = vsel %vm451, %v832, 0
        %v856 = vsel %vm451, %v833, 0
        %v859 = vsel %vm476, %v809, 0
        %861 = vmatprep.subr.bf16.mxu0 0
        %862 = vmatpush1.bf16.msra.mxu0 %v859
        %863 = vmatprep.subr.bf16.mxu0 0
        %864 = vmatpush1.bf16.msra.mxu0 0
        %865 = vmatprep.subr.bf16.mxu0 0
        %866 = vmatpush1.bf16.msra.mxu0 0
        %867 = vmatprep.subr.bf16.mxu0 0
        %868 = vmatpush1.bf16.msra.mxu0 0
        %869 = vmatprep.subr.bf16.mxu0 0
        %870 = vmatpush1.bf16.msra.mxu0 0
        %871 = vmatprep.subr.bf16.mxu0 0
        %872 = vmatpush1.bf16.msra.mxu0 0
        %873 = vmatprep.subr.bf16.mxu0 0
        %874 = vmatpush1.bf16.msra.mxu0 0
        %875 = vmatprep.subr.bf16.mxu0 0
        %876 = vmatpush1.bf16.msra.mxu0 0
        %877 = vmatprep.subr.bf16.mxu0 0
        %878 = vmatpush1.bf16.msra.mxu0 0
        %879 = vmatprep.subr.bf16.mxu0 0
        %880 = vmatpush1.bf16.msra.mxu0 0
        %881 = vmatprep.subr.bf16.mxu0 0
        %882 = vmatpush1.bf16.msra.mxu0 0
        %883 = vmatprep.subr.bf16.mxu0 0
        %884 = vmatpush1.bf16.msra.mxu0 0
        %885 = vmatprep.subr.bf16.mxu0 0
        %886 = vmatpush1.bf16.msra.mxu0 0
        %887 = vmatprep.subr.bf16.mxu0 0
        %888 = vmatpush1.bf16.msra.mxu0 0
        %889 = vmatprep.subr.bf16.mxu0 0
        %890 = vmatpush1.bf16.msra.mxu0 0
        %891 = vmatprep.subr.bf16.mxu0 0
        %892 = vmatpush1.bf16.msra.mxu0 0
        %893 = vmatprep.mubr.bf16.mxu0 0
        %894 = vmatmul.mubr.bf16.gmra.mrb[0].mxu0 %v835
        %v895 = vpop.f32.mrb[0].mxu0
        %v896 = vadd.f32 0.0, %v895
        %v897 = vpop.f32.mrb[0].mxu0
        %v898 = vpop.f32.mrb[0].mxu0
        %v899 = vadd.f32 0.0, %v898
        %v900 = vpop.f32.mrb[0].mxu0
        %901 = vmatprep.mubr.bf16.mxu0 0
        %902 = vmatmul.mubr.bf16.gmra.mrb[0].mxu0 %v838
        %v903 = vpop.f32.mrb[0].mxu0
        %v904 = vadd.f32 0.0, %v903
        %v905 = vpop.f32.mrb[0].mxu0
        %v906 = vpop.f32.mrb[0].mxu0
        %v907 = vadd.f32 0.0, %v906
        %v908 = vpop.f32.mrb[0].mxu0
        %909 = vmatprep.mubr.bf16.mxu0 0
        %910 = vmatmul.mubr.bf16.gmra.mrb[0].mxu0 %v841
        %v911 = vpop.f32.mrb[0].mxu0
        %v912 = vadd.f32 0.0, %v911
        %v913 = vpop.f32.mrb[0].mxu0
        %v914 = vpop.f32.mrb[0].mxu0
        %v915 = vadd.f32 0.0, %v914
        %v916 = vpop.f32.mrb[0].mxu0
        %917 = vmatprep.mubr.bf16.mxu0 0
        %918 = vmatmul.mubr.bf16.gmra.mrb[0].mxu0 %v844
        %v919 = vpop.f32.mrb[0].mxu0
        %v920 = vadd.f32 0.0, %v919
        %v921 = vpop.f32.mrb[0].mxu0
        %v922 = vpop.f32.mrb[0].mxu0
        %v923 = vadd.f32 0.0, %v922
        %v924 = vpop.f32.mrb[0].mxu0
        %925 = vmatprep.mubr.bf16.mxu0 0
        %926 = vmatmul.mubr.bf16.gmra.mrb[0].mxu0 %v847
        %v927 = vpop.f32.mrb[0].mxu0
        %v928 = vadd.f32 0.0, %v927
        %v929 = vpop.f32.mrb[0].mxu0
        %v930 = vpop.f32.mrb[0].mxu0
        %v931 = vadd.f32 0.0, %v930
        %v932 = vpop.f32.mrb[0].mxu0
        %933 = vmatprep.mubr.bf16.mxu0 0
        %934 = vmatmul.mubr.bf16.gmra.mrb[0].mxu0 %v850
        %v935 = vpop.f32.mrb[0].mxu0
        %v936 = vadd.f32 0.0, %v935
        %v937 = vpop.f32.mrb[0].mxu0
        %v938 = vpop.f32.mrb[0].mxu0
        %v939 = vadd.f32 0.0, %v938
        %v940 = vpop.f32.mrb[0].mxu0
        %941 = vmatprep.mubr.bf16.mxu0 0
        %942 = vmatmul.mubr.bf16.gmra.mrb[0].mxu0 %v853
        %v943 = vpop.f32.mrb[0].mxu0
        %v944 = vadd.f32 0.0, %v943
        %v945 = vpop.f32.mrb[0].mxu0
        %v946 = vpop.f32.mrb[0].mxu0
        %v947 = vadd.f32 0.0, %v946
        %v948 = vpop.f32.mrb[0].mxu0
        %949 = vmatprep.mubr.bf16.mxu0 0
        %950 = vmatmul.mubr.bf16.gmra.mrb[0].mxu0 %v856
        %v951 = vpop.f32.mrb[0].mxu0
        %v952 = vadd.f32 0.0, %v951
        %v953 = vpop.f32.mrb[0].mxu0
        %v954 = vpop.f32.mrb[0].mxu0
        %v955 = vadd.f32 0.0, %v954
        %v956 = vpop.f32.mrb[0].mxu0
        %957 = vdwg.mxu0
        %v958 = vadd.f32 %v679, %v896
        %v959 = vadd.f32 %v682, %v899
        %v960 = vadd.f32 %v687, %v904
        %v961 = vadd.f32 %v690, %v907
        %v962 = vadd.f32 %v695, %v912
        %v963 = vadd.f32 %v698, %v915
        %v964 = vadd.f32 %v703, %v920
        %v965 = vadd.f32 %v706, %v923
        %v966 = vadd.f32 %v711, %v928
        %v967 = vadd.f32 %v714, %v931
        %v968 = vadd.f32 %v719, %v936
        %v969 = vadd.f32 %v722, %v939
        %v970 = vadd.f32 %v727, %v944
        %v971 = vadd.f32 %v730, %v947
        %v972 = vadd.f32 %v735, %v952
        %v973 = vadd.f32 %v738, %v955
        %s974 = scalar_lea.vmem %s1, 6
        %v975 = vld [vmem:[%s974] sm:$0x3]
        %v978 = vunpack.c.l.b16 %v223
        %v979 = vunpack.c.l.b16 %v224
        %v980 = vpack.c.b16 %v979, %v978
        %v982 = vsel %vm451, %v980, 0
        %v985 = vsel %vm476, %v975, 0
        %987 = vmatprep.subr.bf16.mxu0 0
        %988 = vmatpush1.bf16.msra.mxu0 %v985
        %989 = vmatprep.subr.bf16.mxu0 0
        %990 = vmatpush1.bf16.msra.mxu0 0
        %991 = vmatprep.subr.bf16.mxu0 0
        %992 = vmatpush1.bf16.msra.mxu0 0
        %993 = vmatprep.subr.bf16.mxu0 0
        %994 = vmatpush1.bf16.msra.mxu0 0
        %995 = vmatprep.subr.bf16.mxu0 0
        %996 = vmatpush1.bf16.msra.mxu0 0
        %997 = vmatprep.subr.bf16.mxu0 0
        %998 = vmatpush1.bf16.msra.mxu0 0
        %999 = vmatprep.subr.bf16.mxu0 0
        %1000 = vmatpush1.bf16.msra.mxu0 0
        %1001 = vmatprep.subr.bf16.mxu0 0
        %1002 = vmatpush1.bf16.msra.mxu0 0
        %1003 = vmatprep.subr.bf16.mxu0 0
        %1004 = vmatpush1.bf16.msra.mxu0 0
        %1005 = vmatprep.subr.bf16.mxu0 0
        %1006 = vmatpush1.bf16.msra.mxu0 0
        %1007 = vmatprep.subr.bf16.mxu0 0
        %1008 = vmatpush1.bf16.msra.mxu0 0
        %1009 = vmatprep.subr.bf16.mxu0 0
        %1010 = vmatpush1.bf16.msra.mxu0 0
        %1011 = vmatprep.subr.bf16.mxu0 0
        %1012 = vmatpush1.bf16.msra.mxu0 0
        %1013 = vmatprep.subr.bf16.mxu0 0
        %1014 = vmatpush1.bf16.msra.mxu0 0
        %1015 = vmatprep.subr.bf16.mxu0 0
        %1016 = vmatpush1.bf16.msra.mxu0 0
        %1017 = vmatprep.subr.bf16.mxu0 0
        %1018 = vmatpush1.bf16.msra.mxu0 0
        %1019 = vmatprep.mubr.bf16.mxu0 0
        %1020 = vmatmul.mubr.bf16.gmra.mrb[0].mxu0 %v621
        %v1021 = vpop.f32.mrb[0].mxu0
        %v1022 = vadd.f32 0.0, %v1021
        %v1023 = vpop.f32.mrb[0].mxu0
        %v1024 = vpop.f32.mrb[0].mxu0
        %v1025 = vadd.f32 0.0, %v1024
        %v1026 = vpop.f32.mrb[0].mxu0
        %1027 = vmatprep.mubr.bf16.mxu0 0
        %1028 = vmatmul.mubr.bf16.gmra.mrb[0].mxu0 %v624
        %v1029 = vpop.f32.mrb[0].mxu0
        %v1030 = vadd.f32 0.0, %v1029
        %v1031 = vpop.f32.mrb[0].mxu0
        %v1032 = vpop.f32.mrb[0].mxu0
        %v1033 = vadd.f32 0.0, %v1032
        %v1034 = vpop.f32.mrb[0].mxu0
        %1035 = vmatprep.mubr.bf16.mxu0 0
        %1036 = vmatmul.mubr.bf16.gmra.mrb[0].mxu0 %v627
        %v1037 = vpop.f32.mrb[0].mxu0
        %v1038 = vadd.f32 0.0, %v1037
        %v1039 = vpop.f32.mrb[0].mxu0
        %v1040 = vpop.f32.mrb[0].mxu0
        %v1041 = vadd.f32 0.0, %v1040
        %v1042 = vpop.f32.mrb[0].mxu0
        %1043 = vmatprep.mubr.bf16.mxu0 0
        %1044 = vmatmul.mubr.bf16.gmra.mrb[0].mxu0 %v630
        %v1045 = vpop.f32.mrb[0].mxu0
        %v1046 = vadd.f32 0.0, %v1045
        %v1047 = vpop.f32.mrb[0].mxu0
        %v1048 = vpop.f32.mrb[0].mxu0
        %v1049 = vadd.f32 0.0, %v1048
        %v1050 = vpop.f32.mrb[0].mxu0
        %1051 = vmatprep.mubr.bf16.mxu0 0
        %1052 = vmatmul.mubr.bf16.gmra.mrb[0].mxu0 %v633
        %v1053 = vpop.f32.mrb[0].mxu0
        %v1054 = vadd.f32 0.0, %v1053
        %v1055 = vpop.f32.mrb[0].mxu0
        %v1056 = vpop.f32.mrb[0].mxu0
        %v1057 = vadd.f32 0.0, %v1056
        %v1058 = vpop.f32.mrb[0].mxu0
        %1059 = vmatprep.mubr.bf16.mxu0 0
        %1060 = vmatmul.mubr.bf16.gmra.mrb[0].mxu0 %v636
        %v1061 = vpop.f32.mrb[0].mxu0
        %v1062 = vadd.f32 0.0, %v1061
        %v1063 = vpop.f32.mrb[0].mxu0
        %v1064 = vpop.f32.mrb[0].mxu0
        %v1065 = vadd.f32 0.0, %v1064
        %v1066 = vpop.f32.mrb[0].mxu0
        %1067 = vmatprep.mubr.bf16.mxu0 0
        %1068 = vmatmul.mubr.bf16.gmra.mrb[0].mxu0 %v639
        %v1069 = vpop.f32.mrb[0].mxu0
        %v1070 = vadd.f32 0.0, %v1069
        %v1071 = vpop.f32.mrb[0].mxu0
        %v1072 = vpop.f32.mrb[0].mxu0
        %v1073 = vadd.f32 0.0, %v1072
        %v1074 = vpop.f32.mrb[0].mxu0
        %1075 = vmatprep.mubr.bf16.mxu0 0
        %1076 = vmatmul.mubr.bf16.gmra.mrb[0].mxu0 %v982
        %v1077 = vpop.f32.mrb[0].mxu0
        %v1078 = vadd.f32 0.0, %v1077
        %v1079 = vpop.f32.mrb[0].mxu0
        %v1080 = vpop.f32.mrb[0].mxu0
        %v1081 = vadd.f32 0.0, %v1080
        %v1082 = vpop.f32.mrb[0].mxu0
        %1083 = vdwg.mxu0
        %v1084 = vadd.f32 %v958, %v1022
        %v1085 = vadd.f32 %v959, %v1025
        %v1086 = vadd.f32 %v960, %v1030
        %v1087 = vadd.f32 %v961, %v1033
        %v1088 = vadd.f32 %v962, %v1038
        %v1089 = vadd.f32 %v963, %v1041
        %v1090 = vadd.f32 %v964, %v1046
        %v1091 = vadd.f32 %v965, %v1049
        %v1092 = vadd.f32 %v966, %v1054
        %v1093 = vadd.f32 %v967, %v1057
        %v1094 = vadd.f32 %v968, %v1062
        %v1095 = vadd.f32 %v969, %v1065
        %v1096 = vadd.f32 %v970, %v1070
        %v1097 = vadd.f32 %v971, %v1073
        %v1098 = vadd.f32 %v972, %v1078
        %v1099 = vadd.f32 %v973, %v1081
        %v1101 = vshrl.u32 %v223, 16
        %v1103 = vrot.slane %v1101, 4
        %v1104 = vshll.u32 %v223, 16
        %v1106 = vrot.slane %v1104, 5
        %v1107 = vor.u32 %v1103, %v1106
        %v1108 = vrot.slane %v1107, 4
        %v1110 = vshll.u32 %v224, 16
        %v1112 = vrot.slane %v1110, 5
        %v1113 = vsel %vm232, %v1108, %v1112
        %v1114 = vshrl.u32 %v224, 16
        %v1116 = vrot.slane %v1114, 4
        %v1117 = vor.u32 %v1116, %v1112
        %v1118 = vrot.slane %v1117, 4
        %v1120 = vshll.u32 %v225, 16
        %v1122 = vrot.slane %v1120, 5
        %v1123 = vsel %vm232, %v1118, %v1122
        %s1124 = scalar_lea.vmem %s1, 8
        %v1125 = vld [vmem:[%s1124] sm:$0x3]
        %v1126 = vunpack.c.l.b16 %v1113
        %v1127 = vunpack.c.l.b16 %v1123
        %v1128 = vpack.c.b16 %v1127, %v1126
        %v1130 = vsel %vm451, %v1128, 0
        %v1133 = vsel %vm476, %v1125, 0
        %1135 = vmatprep.subr.bf16.mxu0 0
        %1136 = vmatpush1.bf16.msra.mxu0 %v1133
        %1137 = vmatprep.subr.bf16.mxu0 0
        %1138 = vmatpush1.bf16.msra.mxu0 0
        %1139 = vmatprep.subr.bf16.mxu0 0
        %1140 = vmatpush1.bf16.msra.mxu0 0
        %1141 = vmatprep.subr.bf16.mxu0 0
        %1142 = vmatpush1.bf16.msra.mxu0 0
        %1143 = vmatprep.subr.bf16.mxu0 0
        %1144 = vmatpush1.bf16.msra.mxu0 0
        %1145 = vmatprep.subr.bf16.mxu0 0
        %1146 = vmatpush1.bf16.msra.mxu0 0
        %1147 = vmatprep.subr.bf16.mxu0 0
        %1148 = vmatpush1.bf16.msra.mxu0 0
        %1149 = vmatprep.subr.bf16.mxu0 0
        %1150 = vmatpush1.bf16.msra.mxu0 0
        %1151 = vmatprep.subr.bf16.mxu0 0
        %1152 = vmatpush1.bf16.msra.mxu0 0
        %1153 = vmatprep.subr.bf16.mxu0 0
        %1154 = vmatpush1.bf16.msra.mxu0 0
        %1155 = vmatprep.subr.bf16.mxu0 0
        %1156 = vmatpush1.bf16.msra.mxu0 0
        %1157 = vmatprep.subr.bf16.mxu0 0
        %1158 = vmatpush1.bf16.msra.mxu0 0
        %1159 = vmatprep.subr.bf16.mxu0 0
        %1160 = vmatpush1.bf16.msra.mxu0 0
        %1161 = vmatprep.subr.bf16.mxu0 0
        %1162 = vmatpush1.bf16.msra.mxu0 0
        %1163 = vmatprep.subr.bf16.mxu0 0
        %1164 = vmatpush1.bf16.msra.mxu0 0
        %1165 = vmatprep.subr.bf16.mxu0 0
        %1166 = vmatpush1.bf16.msra.mxu0 0
        %1167 = vmatprep.mubr.bf16.mxu0 0
        %1168 = vmatmul.mubr.bf16.gmra.mrb[0].mxu0 %v456
        %v1169 = vpop.f32.mrb[0].mxu0
        %v1170 = vadd.f32 0.0, %v1169
        %v1171 = vpop.f32.mrb[0].mxu0
        %v1172 = vpop.f32.mrb[0].mxu0
        %v1173 = vadd.f32 0.0, %v1172
        %v1174 = vpop.f32.mrb[0].mxu0
        %1175 = vmatprep.mubr.bf16.mxu0 0
        %1176 = vmatmul.mubr.bf16.gmra.mrb[0].mxu0 %v459
        %v1177 = vpop.f32.mrb[0].mxu0
        %v1178 = vadd.f32 0.0, %v1177
        %v1179 = vpop.f32.mrb[0].mxu0
        %v1180 = vpop.f32.mrb[0].mxu0
        %v1181 = vadd.f32 0.0, %v1180
        %v1182 = vpop.f32.mrb[0].mxu0
        %1183 = vmatprep.mubr.bf16.mxu0 0
        %1184 = vmatmul.mubr.bf16.gmra.mrb[0].mxu0 %v462
        %v1185 = vpop.f32.mrb[0].mxu0
        %v1186 = vadd.f32 0.0, %v1185
        %v1187 = vpop.f32.mrb[0].mxu0
        %v1188 = vpop.f32.mrb[0].mxu0
        %v1189 = vadd.f32 0.0, %v1188
        %v1190 = vpop.f32.mrb[0].mxu0
        %1191 = vmatprep.mubr.bf16.mxu0 0
        %1192 = vmatmul.mubr.bf16.gmra.mrb[0].mxu0 %v465
        %v1193 = vpop.f32.mrb[0].mxu0
        %v1194 = vadd.f32 0.0, %v1193
        %v1195 = vpop.f32.mrb[0].mxu0
        %v1196 = vpop.f32.mrb[0].mxu0
        %v1197 = vadd.f32 0.0, %v1196
        %v1198 = vpop.f32.mrb[0].mxu0
        %1199 = vmatprep.mubr.bf16.mxu0 0
        %1200 = vmatmul.mubr.bf16.gmra.mrb[0].mxu0 %v468
        %v1201 = vpop.f32.mrb[0].mxu0
        %v1202 = vadd.f32 0.0, %v1201
        %v1203 = vpop.f32.mrb[0].mxu0
        %v1204 = vpop.f32.mrb[0].mxu0
        %v1205 = vadd.f32 0.0, %v1204
        %v1206 = vpop.f32.mrb[0].mxu0
        %1207 = vmatprep.mubr.bf16.mxu0 0
        %1208 = vmatmul.mubr.bf16.gmra.mrb[0].mxu0 %v471
        %v1209 = vpop.f32.mrb[0].mxu0
        %v1210 = vadd.f32 0.0, %v1209
        %v1211 = vpop.f32.mrb[0].mxu0
        %v1212 = vpop.f32.mrb[0].mxu0
        %v1213 = vadd.f32 0.0, %v1212
        %v1214 = vpop.f32.mrb[0].mxu0
        %1215 = vmatprep.mubr.bf16.mxu0 0
        %1216 = vmatmul.mubr.bf16.gmra.mrb[0].mxu0 %v474
        %v1217 = vpop.f32.mrb[0].mxu0
        %v1218 = vadd.f32 0.0, %v1217
        %v1219 = vpop.f32.mrb[0].mxu0
        %v1220 = vpop.f32.mrb[0].mxu0
        %v1221 = vadd.f32 0.0, %v1220
        %v1222 = vpop.f32.mrb[0].mxu0
        %1223 = vmatprep.mubr.bf16.mxu0 0
        %1224 = vmatmul.mubr.bf16.gmra.mrb[0].mxu0 %v1130
        %v1225 = vpop.f32.mrb[0].mxu0
        %v1226 = vadd.f32 0.0, %v1225
        %v1227 = vpop.f32.mrb[0].mxu0
        %v1228 = vpop.f32.mrb[0].mxu0
        %v1229 = vadd.f32 0.0, %v1228
        %v1230 = vpop.f32.mrb[0].mxu0
        %1231 = vdwg.mxu0
        %v1232 = vadd.f32 %v1084, %v1170
        %v1233 = vadd.f32 %v1085, %v1173
        %v1234 = vadd.f32 %v1086, %v1178
        %v1235 = vadd.f32 %v1087, %v1181
        %v1236 = vadd.f32 %v1088, %v1186
        %v1237 = vadd.f32 %v1089, %v1189
        %v1238 = vadd.f32 %v1090, %v1194
        %v1239 = vadd.f32 %v1091, %v1197
        %v1240 = vadd.f32 %v1092, %v1202
        %v1241 = vadd.f32 %v1093, %v1205
        %v1242 = vadd.f32 %v1094, %v1210
        %v1243 = vadd.f32 %v1095, %v1213
        %v1244 = vadd.f32 %v1096, %v1218
        %v1245 = vadd.f32 %v1097, %v1221
        %v1246 = vadd.f32 %v1098, %v1226
        %v1247 = vadd.f32 %v1099, %v1229
        %v1249 = vrot.slane %v223, 5
        %v1250 = vrot.slane %v1249, 4
        %v1251 = vrot.slane %v224, 5
        %v1252 = vsel %vm751, %v1250, %v1251
        %v1253 = vrot.slane %v1251, 4
        %v1254 = vrot.slane %v225, 5
        %v1255 = vsel %vm751, %v1253, %v1254
        %s1256 = scalar_lea.vmem %s1, 10
        %v1257 = vld [vmem:[%s1256] sm:$0x3]
        %v1258 = vunpack.c.l.b16 %v1252
        %v1259 = vunpack.c.l.b16 %v1255
        %v1260 = vpack.c.b16 %v1259, %v1258
        %v1262 = vsel %vm451, %v1260, 0
        %v1265 = vsel %vm476, %v1257, 0
        %1267 = vmatprep.subr.bf16.mxu0 0
        %1268 = vmatpush1.bf16.msra.mxu0 %v1265
        %1269 = vmatprep.subr.bf16.mxu0 0
        %1270 = vmatpush1.bf16.msra.mxu0 0
        %1271 = vmatprep.subr.bf16.mxu0 0
        %1272 = vmatpush1.bf16.msra.mxu0 0
        %1273 = vmatprep.subr.bf16.mxu0 0
        %1274 = vmatpush1.bf16.msra.mxu0 0
        %1275 = vmatprep.subr.bf16.mxu0 0
        %1276 = vmatpush1.bf16.msra.mxu0 0
        %1277 = vmatprep.subr.bf16.mxu0 0
        %1278 = vmatpush1.bf16.msra.mxu0 0
        %1279 = vmatprep.subr.bf16.mxu0 0
        %1280 = vmatpush1.bf16.msra.mxu0 0
        %1281 = vmatprep.subr.bf16.mxu0 0
        %1282 = vmatpush1.bf16.msra.mxu0 0
        %1283 = vmatprep.subr.bf16.mxu0 0
        %1284 = vmatpush1.bf16.msra.mxu0 0
        %1285 = vmatprep.subr.bf16.mxu0 0
        %1286 = vmatpush1.bf16.msra.mxu0 0
        %1287 = vmatprep.subr.bf16.mxu0 0
        %1288 = vmatpush1.bf16.msra.mxu0 0
        %1289 = vmatprep.subr.bf16.mxu0 0
        %1290 = vmatpush1.bf16.msra.mxu0 0
        %1291 = vmatprep.subr.bf16.mxu0 0
        %1292 = vmatpush1.bf16.msra.mxu0 0
        %1293 = vmatprep.subr.bf16.mxu0 0
        %1294 = vmatpush1.bf16.msra.mxu0 0
        %1295 = vmatprep.subr.bf16.mxu0 0
        %1296 = vmatpush1.bf16.msra.mxu0 0
        %1297 = vmatprep.subr.bf16.mxu0 0
        %1298 = vmatpush1.bf16.msra.mxu0 0
        %1299 = vmatprep.mubr.bf16.mxu0 0
        %1300 = vmatmul.mubr.bf16.gmra.mrb[0].mxu0 %v838
        %v1301 = vpop.f32.mrb[0].mxu0
        %v1302 = vadd.f32 0.0, %v1301
        %v1303 = vpop.f32.mrb[0].mxu0
        %v1304 = vpop.f32.mrb[0].mxu0
        %v1305 = vadd.f32 0.0, %v1304
        %v1306 = vpop.f32.mrb[0].mxu0
        %1307 = vmatprep.mubr.bf16.mxu0 0
        %1308 = vmatmul.mubr.bf16.gmra.mrb[0].mxu0 %v841
        %v1309 = vpop.f32.mrb[0].mxu0
        %v1310 = vadd.f32 0.0, %v1309
        %v1311 = vpop.f32.mrb[0].mxu0
        %v1312 = vpop.f32.mrb[0].mxu0
        %v1313 = vadd.f32 0.0, %v1312
        %v1314 = vpop.f32.mrb[0].mxu0
        %1315 = vmatprep.mubr.bf16.mxu0 0
        %1316 = vmatmul.mubr.bf16.gmra.mrb[0].mxu0 %v844
        %v1317 = vpop.f32.mrb[0].mxu0
        %v1318 = vadd.f32 0.0, %v1317
        %v1319 = vpop.f32.mrb[0].mxu0
        %v1320 = vpop.f32.mrb[0].mxu0
        %v1321 = vadd.f32 0.0, %v1320
        %v1322 = vpop.f32.mrb[0].mxu0
        %1323 = vmatprep.mubr.bf16.mxu0 0
        %1324 = vmatmul.mubr.bf16.gmra.mrb[0].mxu0 %v847
        %v1325 = vpop.f32.mrb[0].mxu0
        %v1326 = vadd.f32 0.0, %v1325
        %v1327 = vpop.f32.mrb[0].mxu0
        %v1328 = vpop.f32.mrb[0].mxu0
        %v1329 = vadd.f32 0.0, %v1328
        %v1330 = vpop.f32.mrb[0].mxu0
        %1331 = vmatprep.mubr.bf16.mxu0 0
        %1332 = vmatmul.mubr.bf16.gmra.mrb[0].mxu0 %v850
        %v1333 = vpop.f32.mrb[0].mxu0
        %v1334 = vadd.f32 0.0, %v1333
        %v1335 = vpop.f32.mrb[0].mxu0
        %v1336 = vpop.f32.mrb[0].mxu0
        %v1337 = vadd.f32 0.0, %v1336
        %v1338 = vpop.f32.mrb[0].mxu0
        %1339 = vmatprep.mubr.bf16.mxu0 0
        %1340 = vmatmul.mubr.bf16.gmra.mrb[0].mxu0 %v853
        %v1341 = vpop.f32.mrb[0].mxu0
        %v1342 = vadd.f32 0.0, %v1341
        %v1343 = vpop.f32.mrb[0].mxu0
        %v1344 = vpop.f32.mrb[0].mxu0
        %v1345 = vadd.f32 0.0, %v1344
        %v1346 = vpop.f32.mrb[0].mxu0
        %1347 = vmatprep.mubr.bf16.mxu0 0
        %1348 = vmatmul.mubr.bf16.gmra.mrb[0].mxu0 %v856
        %v1349 = vpop.f32.mrb[0].mxu0
        %v1350 = vadd.f32 0.0, %v1349
        %v1351 = vpop.f32.mrb[0].mxu0
        %v1352 = vpop.f32.mrb[0].mxu0
        %v1353 = vadd.f32 0.0, %v1352
        %v1354 = vpop.f32.mrb[0].mxu0
        %1355 = vmatprep.mubr.bf16.mxu0 0
        %1356 = vmatmul.mubr.bf16.gmra.mrb[0].mxu0 %v1262
        %v1357 = vpop.f32.mrb[0].mxu0
        %v1358 = vadd.f32 0.0, %v1357
        %v1359 = vpop.f32.mrb[0].mxu0
        %v1360 = vpop.f32.mrb[0].mxu0
        %v1361 = vadd.f32 0.0, %v1360
        %v1362 = vpop.f32.mrb[0].mxu0
        %1363 = vdwg.mxu0
        %v1364 = vadd.f32 %v1232, %v1302
        %v1365 = vadd.f32 %v1233, %v1305
        %v1366 = vadd.f32 %v1234, %v1310
        %v1367 = vadd.f32 %v1235, %v1313
        %v1368 = vadd.f32 %v1236, %v1318
        %v1369 = vadd.f32 %v1237, %v1321
        %v1370 = vadd.f32 %v1238, %v1326
        %v1371 = vadd.f32 %v1239, %v1329
        %v1372 = vadd.f32 %v1240, %v1334
        %v1373 = vadd.f32 %v1241, %v1337
        %v1374 = vadd.f32 %v1242, %v1342
        %v1375 = vadd.f32 %v1243, %v1345
        %v1376 = vadd.f32 %v1244, %v1350
        %v1377 = vadd.f32 %v1245, %v1353
        %v1378 = vadd.f32 %v1246, %v1358
        %v1379 = vadd.f32 %v1247, %v1361
        %s1380 = scalar_lea.vmem %s1, 12
        %v1381 = vld [vmem:[%s1380] sm:$0x3]
        %v1384 = vunpack.c.l.b16 %v226
        %v1385 = vunpack.c.l.b16 %v227
        %v1386 = vpack.c.b16 %v1385, %v1384
        %v1388 = vsel %vm451, %v1386, 0
        %v1391 = vsel %vm476, %v1381, 0
        %1393 = vmatprep.subr.bf16.mxu0 0
        %1394 = vmatpush1.bf16.msra.mxu0 %v1391
        %1395 = vmatprep.subr.bf16.mxu0 0
        %1396 = vmatpush1.bf16.msra.mxu0 0
        %1397 = vmatprep.subr.bf16.mxu0 0
        %1398 = vmatpush1.bf16.msra.mxu0 0
        %1399 = vmatprep.subr.bf16.mxu0 0
        %1400 = vmatpush1.bf16.msra.mxu0 0
        %1401 = vmatprep.subr.bf16.mxu0 0
        %1402 = vmatpush1.bf16.msra.mxu0 0
        %1403 = vmatprep.subr.bf16.mxu0 0
        %1404 = vmatpush1.bf16.msra.mxu0 0
        %1405 = vmatprep.subr.bf16.mxu0 0
        %1406 = vmatpush1.bf16.msra.mxu0 0
        %1407 = vmatprep.subr.bf16.mxu0 0
        %1408 = vmatpush1.bf16.msra.mxu0 0
        %1409 = vmatprep.subr.bf16.mxu0 0
        %1410 = vmatpush1.bf16.msra.mxu0 0
        %1411 = vmatprep.subr.bf16.mxu0 0
        %1412 = vmatpush1.bf16.msra.mxu0 0
        %1413 = vmatprep.subr.bf16.mxu0 0
        %1414 = vmatpush1.bf16.msra.mxu0 0
        %1415 = vmatprep.subr.bf16.mxu0 0
        %1416 = vmatpush1.bf16.msra.mxu0 0
        %1417 = vmatprep.subr.bf16.mxu0 0
        %1418 = vmatpush1.bf16.msra.mxu0 0
        %1419 = vmatprep.subr.bf16.mxu0 0
        %1420 = vmatpush1.bf16.msra.mxu0 0
        %1421 = vmatprep.subr.bf16.mxu0 0
        %1422 = vmatpush1.bf16.msra.mxu0 0
        %1423 = vmatprep.subr.bf16.mxu0 0
        %1424 = vmatpush1.bf16.msra.mxu0 0
        %1425 = vmatprep.mubr.bf16.mxu0 0
        %1426 = vmatmul.mubr.bf16.gmra.mrb[0].mxu0 %v624
        %v1427 = vpop.f32.mrb[0].mxu0
        %v1428 = vadd.f32 0.0, %v1427
        %v1429 = vpop.f32.mrb[0].mxu0
        %v1430 = vpop.f32.mrb[0].mxu0
        %v1431 = vadd.f32 0.0, %v1430
        %v1432 = vpop.f32.mrb[0].mxu0
        %1433 = vmatprep.mubr.bf16.mxu0 0
        %1434 = vmatmul.mubr.bf16.gmra.mrb[0].mxu0 %v627
        %v1435 = vpop.f32.mrb[0].mxu0
        %v1436 = vadd.f32 0.0, %v1435
        %v1437 = vpop.f32.mrb[0].mxu0
        %v1438 = vpop.f32.mrb[0].mxu0
        %v1439 = vadd.f32 0.0, %v1438
        %v1440 = vpop.f32.mrb[0].mxu0
        %1441 = vmatprep.mubr.bf16.mxu0 0
        %1442 = vmatmul.mubr.bf16.gmra.mrb[0].mxu0 %v630
        %v1443 = vpop.f32.mrb[0].mxu0
        %v1444 = vadd.f32 0.0, %v1443
        %v1445 = vpop.f32.mrb[0].mxu0
        %v1446 = vpop.f32.mrb[0].mxu0
        %v1447 = vadd.f32 0.0, %v1446
        %v1448 = vpop.f32.mrb[0].mxu0
        %1449 = vmatprep.mubr.bf16.mxu0 0
        %1450 = vmatmul.mubr.bf16.gmra.mrb[0].mxu0 %v633
        %v1451 = vpop.f32.mrb[0].mxu0
        %v1452 = vadd.f32 0.0, %v1451
        %v1453 = vpop.f32.mrb[0].mxu0
        %v1454 = vpop.f32.mrb[0].mxu0
        %v1455 = vadd.f32 0.0, %v1454
        %v1456 = vpop.f32.mrb[0].mxu0
        %1457 = vmatprep.mubr.bf16.mxu0 0
        %1458 = vmatmul.mubr.bf16.gmra.mrb[0].mxu0 %v636
        %v1459 = vpop.f32.mrb[0].mxu0
        %v1460 = vadd.f32 0.0, %v1459
        %v1461 = vpop.f32.mrb[0].mxu0
        %v1462 = vpop.f32.mrb[0].mxu0
        %v1463 = vadd.f32 0.0, %v1462
        %v1464 = vpop.f32.mrb[0].mxu0
        %1465 = vmatprep.mubr.bf16.mxu0 0
        %1466 = vmatmul.mubr.bf16.gmra.mrb[0].mxu0 %v639
        %v1467 = vpop.f32.mrb[0].mxu0
        %v1468 = vadd.f32 0.0, %v1467
        %v1469 = vpop.f32.mrb[0].mxu0
        %v1470 = vpop.f32.mrb[0].mxu0
        %v1471 = vadd.f32 0.0, %v1470
        %v1472 = vpop.f32.mrb[0].mxu0
        %1473 = vmatprep.mubr.bf16.mxu0 0
        %1474 = vmatmul.mubr.bf16.gmra.mrb[0].mxu0 %v982
        %v1475 = vpop.f32.mrb[0].mxu0
        %v1476 = vadd.f32 0.0, %v1475
        %v1477 = vpop.f32.mrb[0].mxu0
        %v1478 = vpop.f32.mrb[0].mxu0
        %v1479 = vadd.f32 0.0, %v1478
        %v1480 = vpop.f32.mrb[0].mxu0
        %1481 = vmatprep.mubr.bf16.mxu0 0
        %1482 = vmatmul.mubr.bf16.gmra.mrb[0].mxu0 %v1388
        %v1483 = vpop.f32.mrb[0].mxu0
        %v1484 = vadd.f32 0.0, %v1483
        %v1485 = vpop.f32.mrb[0].mxu0
        %v1486 = vpop.f32.mrb[0].mxu0
        %v1487 = vadd.f32 0.0, %v1486
        %v1488 = vpop.f32.mrb[0].mxu0
        %1489 = vdwg.mxu0
        %v1490 = vadd.f32 %v1364, %v1428
        %v1491 = vadd.f32 %v1365, %v1431
        %v1492 = vadd.f32 %v1366, %v1436
        %v1493 = vadd.f32 %v1367, %v1439
        %v1494 = vadd.f32 %v1368, %v1444
        %v1495 = vadd.f32 %v1369, %v1447
        %v1496 = vadd.f32 %v1370, %v1452
        %v1497 = vadd.f32 %v1371, %v1455
        %v1498 = vadd.f32 %v1372, %v1460
        %v1499 = vadd.f32 %v1373, %v1463
        %v1500 = vadd.f32 %v1374, %v1468
        %v1501 = vadd.f32 %v1375, %v1471
        %v1502 = vadd.f32 %v1376, %v1476
        %v1503 = vadd.f32 %v1377, %v1479
        %v1504 = vadd.f32 %v1378, %v1484
        %v1505 = vadd.f32 %v1379, %v1487
        %v1507 = vshrl.u32 %v226, 16
        %v1509 = vrot.slane %v1507, 4
        %v1510 = vshll.u32 %v226, 16
        %v1512 = vrot.slane %v1510, 5
        %v1513 = vor.u32 %v1509, %v1512
        %v1514 = vrot.slane %v1513, 4
        %v1516 = vshll.u32 %v227, 16
        %v1518 = vrot.slane %v1516, 5
        %v1519 = vsel %vm232, %v1514, %v1518
        %v1520 = vshrl.u32 %v227, 16
        %v1522 = vrot.slane %v1520, 4
        %v1523 = vor.u32 %v1522, %v1518
        %v1524 = vrot.slane %v1523, 4
        %v1526 = vshll.u32 %v228, 16
        %v1528 = vrot.slane %v1526, 5
        %v1529 = vsel %vm232, %v1524, %v1528
        %s1530 = scalar_lea.vmem %s1, 14
        %v1531 = vld [vmem:[%s1530] sm:$0x3]
        %v1532 = vunpack.c.l.b16 %v1519
        %v1533 = vunpack.c.l.b16 %v1529
        %v1534 = vpack.c.b16 %v1533, %v1532
        %v1536 = vsel %vm451, %v1534, 0
        %v1539 = vsel %vm476, %v1531, 0
        %1541 = vmatprep.subr.bf16.mxu0 0
        %1542 = vmatpush1.bf16.msra.mxu0 %v1539
        %1543 = vmatprep.subr.bf16.mxu0 0
        %1544 = vmatpush1.bf16.msra.mxu0 0
        %1545 = vmatprep.subr.bf16.mxu0 0
        %1546 = vmatpush1.bf16.msra.mxu0 0
        %1547 = vmatprep.subr.bf16.mxu0 0
        %1548 = vmatpush1.bf16.msra.mxu0 0
        %1549 = vmatprep.subr.bf16.mxu0 0
        %1550 = vmatpush1.bf16.msra.mxu0 0
        %1551 = vmatprep.subr.bf16.mxu0 0
        %1552 = vmatpush1.bf16.msra.mxu0 0
        %1553 = vmatprep.subr.bf16.mxu0 0
        %1554 = vmatpush1.bf16.msra.mxu0 0
        %1555 = vmatprep.subr.bf16.mxu0 0
        %1556 = vmatpush1.bf16.msra.mxu0 0
        %1557 = vmatprep.subr.bf16.mxu0 0
        %1558 = vmatpush1.bf16.msra.mxu0 0
        %1559 = vmatprep.subr.bf16.mxu0 0
        %1560 = vmatpush1.bf16.msra.mxu0 0
        %1561 = vmatprep.subr.bf16.mxu0 0
        %1562 = vmatpush1.bf16.msra.mxu0 0
        %1563 = vmatprep.subr.bf16.mxu0 0
        %1564 = vmatpush1.bf16.msra.mxu0 0
        %1565 = vmatprep.subr.bf16.mxu0 0
        %1566 = vmatpush1.bf16.msra.mxu0 0
        %1567 = vmatprep.subr.bf16.mxu0 0
        %1568 = vmatpush1.bf16.msra.mxu0 0
        %1569 = vmatprep.subr.bf16.mxu0 0
        %1570 = vmatpush1.bf16.msra.mxu0 0
        %1571 = vmatprep.subr.bf16.mxu0 0
        %1572 = vmatpush1.bf16.msra.mxu0 0
        %1573 = vmatprep.mubr.bf16.mxu0 0
        %1574 = vmatmul.mubr.bf16.gmra.mrb[0].mxu0 %v459
        %v1575 = vpop.f32.mrb[0].mxu0
        %v1576 = vadd.f32 0.0, %v1575
        %v1577 = vpop.f32.mrb[0].mxu0
        %v1578 = vpop.f32.mrb[0].mxu0
        %v1579 = vadd.f32 0.0, %v1578
        %v1580 = vpop.f32.mrb[0].mxu0
        %1581 = vmatprep.mubr.bf16.mxu0 0
        %1582 = vmatmul.mubr.bf16.gmra.mrb[0].mxu0 %v462
        %v1583 = vpop.f32.mrb[0].mxu0
        %v1584 = vadd.f32 0.0, %v1583
        %v1585 = vpop.f32.mrb[0].mxu0
        %v1586 = vpop.f32.mrb[0].mxu0
        %v1587 = vadd.f32 0.0, %v1586
        %v1588 = vpop.f32.mrb[0].mxu0
        %1589 = vmatprep.mubr.bf16.mxu0 0
        %1590 = vmatmul.mubr.bf16.gmra.mrb[0].mxu0 %v465
        %v1591 = vpop.f32.mrb[0].mxu0
        %v1592 = vadd.f32 0.0, %v1591
        %v1593 = vpop.f32.mrb[0].mxu0
        %v1594 = vpop.f32.mrb[0].mxu0
        %v1595 = vadd.f32 0.0, %v1594
        %v1596 = vpop.f32.mrb[0].mxu0
        %1597 = vmatprep.mubr.bf16.mxu0 0
        %1598 = vmatmul.mubr.bf16.gmra.mrb[0].mxu0 %v468
        %v1599 = vpop.f32.mrb[0].mxu0
        %v1600 = vadd.f32 0.0, %v1599
        %v1601 = vpop.f32.mrb[0].mxu0
        %v1602 = vpop.f32.mrb[0].mxu0
        %v1603 = vadd.f32 0.0, %v1602
        %v1604 = vpop.f32.mrb[0].mxu0
        %1605 = vmatprep.mubr.bf16.mxu0 0
        %1606 = vmatmul.mubr.bf16.gmra.mrb[0].mxu0 %v471
        %v1607 = vpop.f32.mrb[0].mxu0
        %v1608 = vadd.f32 0.0, %v1607
        %v1609 = vpop.f32.mrb[0].mxu0
        %v1610 = vpop.f32.mrb[0].mxu0
        %v1611 = vadd.f32 0.0, %v1610
        %v1612 = vpop.f32.mrb[0].mxu0
        %1613 = vmatprep.mubr.bf16.mxu0 0
        %1614 = vmatmul.mubr.bf16.gmra.mrb[0].mxu0 %v474
        %v1615 = vpop.f32.mrb[0].mxu0
        %v1616 = vadd.f32 0.0, %v1615
        %v1617 = vpop.f32.mrb[0].mxu0
        %v1618 = vpop.f32.mrb[0].mxu0
        %v1619 = vadd.f32 0.0, %v1618
        %v1620 = vpop.f32.mrb[0].mxu0
        %1621 = vmatprep.mubr.bf16.mxu0 0
        %1622 = vmatmul.mubr.bf16.gmra.mrb[0].mxu0 %v1130
        %v1623 = vpop.f32.mrb[0].mxu0
        %v1624 = vadd.f32 0.0, %v1623
        %v1625 = vpop.f32.mrb[0].mxu0
        %v1626 = vpop.f32.mrb[0].mxu0
        %v1627 = vadd.f32 0.0, %v1626
        %v1628 = vpop.f32.mrb[0].mxu0
        %1629 = vmatprep.mubr.bf16.mxu0 0
        %1630 = vmatmul.mubr.bf16.gmra.mrb[0].mxu0 %v1536
        %v1631 = vpop.f32.mrb[0].mxu0
        %v1632 = vadd.f32 0.0, %v1631
        %v1633 = vpop.f32.mrb[0].mxu0
        %v1634 = vpop.f32.mrb[0].mxu0
        %v1635 = vadd.f32 0.0, %v1634
        %v1636 = vpop.f32.mrb[0].mxu0
        %1637 = vdwg.mxu0
        %v1638 = vadd.f32 %v1490, %v1576
        %v1639 = vadd.f32 %v1491, %v1579
        %v1640 = vadd.f32 %v1492, %v1584
        %v1641 = vadd.f32 %v1493, %v1587
        %v1642 = vadd.f32 %v1494, %v1592
        %v1643 = vadd.f32 %v1495, %v1595
        %v1644 = vadd.f32 %v1496, %v1600
        %v1645 = vadd.f32 %v1497, %v1603
        %v1646 = vadd.f32 %v1498, %v1608
        %v1647 = vadd.f32 %v1499, %v1611
        %v1648 = vadd.f32 %v1500, %v1616
        %v1649 = vadd.f32 %v1501, %v1619
        %v1650 = vadd.f32 %v1502, %v1624
        %v1651 = vadd.f32 %v1503, %v1627
        %v1652 = vadd.f32 %v1504, %v1632
        %v1653 = vadd.f32 %v1505, %v1635
        %v1655 = vrot.slane %v226, 5
        %v1656 = vrot.slane %v1655, 4
        %v1657 = vrot.slane %v227, 5
        %v1658 = vsel %vm751, %v1656, %v1657
        %v1659 = vrot.slane %v1657, 4
        %v1660 = vrot.slane %v228, 5
        %v1661 = vsel %vm751, %v1659, %v1660
        %s1662 = scalar_lea.vmem %s1, 16
        %v1663 = vld [vmem:[%s1662] sm:$0x3]
        %v1664 = vunpack.c.l.b16 %v1658
        %v1665 = vunpack.c.l.b16 %v1661
        %v1666 = vpack.c.b16 %v1665, %v1664
        %v1668 = vsel %vm451, %v1666, 0
        %v1671 = vsel %vm476, %v1663, 0
        %1673 = vmatprep.subr.bf16.mxu0 0
        %1674 = vmatpush1.bf16.msra.mxu0 %v1671
        %1675 = vmatprep.subr.bf16.mxu0 0
        %1676 = vmatpush1.bf16.msra.mxu0 0
        %1677 = vmatprep.subr.bf16.mxu0 0
        %1678 = vmatpush1.bf16.msra.mxu0 0
        %1679 = vmatprep.subr.bf16.mxu0 0
        %1680 = vmatpush1.bf16.msra.mxu0 0
        %1681 = vmatprep.subr.bf16.mxu0 0
        %1682 = vmatpush1.bf16.msra.mxu0 0
        %1683 = vmatprep.subr.bf16.mxu0 0
        %1684 = vmatpush1.bf16.msra.mxu0 0
        %1685 = vmatprep.subr.bf16.mxu0 0
        %1686 = vmatpush1.bf16.msra.mxu0 0
        %1687 = vmatprep.subr.bf16.mxu0 0
        %1688 = vmatpush1.bf16.msra.mxu0 0
        %1689 = vmatprep.subr.bf16.mxu0 0
        %1690 = vmatpush1.bf16.msra.mxu0 0
        %1691 = vmatprep.subr.bf16.mxu0 0
        %1692 = vmatpush1.bf16.msra.mxu0 0
        %1693 = vmatprep.subr.bf16.mxu0 0
        %1694 = vmatpush1.bf16.msra.mxu0 0
        %1695 = vmatprep.subr.bf16.mxu0 0
        %1696 = vmatpush1.bf16.msra.mxu0 0
        %1697 = vmatprep.subr.bf16.mxu0 0
        %1698 = vmatpush1.bf16.msra.mxu0 0
        %1699 = vmatprep.subr.bf16.mxu0 0
        %1700 = vmatpush1.bf16.msra.mxu0 0
        %1701 = vmatprep.subr.bf16.mxu0 0
        %1702 = vmatpush1.bf16.msra.mxu0 0
        %1703 = vmatprep.subr.bf16.mxu0 0
        %1704 = vmatpush1.bf16.msra.mxu0 0
        %1705 = vmatprep.mubr.bf16.mxu0 0
        %1706 = vmatmul.mubr.bf16.gmra.mrb[0].mxu0 %v841
        %v1707 = vpop.f32.mrb[0].mxu0
        %v1708 = vadd.f32 0.0, %v1707
        %v1709 = vpop.f32.mrb[0].mxu0
        %v1710 = vpop.f32.mrb[0].mxu0
        %v1711 = vadd.f32 0.0, %v1710
        %v1712 = vpop.f32.mrb[0].mxu0
        %1713 = vmatprep.mubr.bf16.mxu0 0
        %1714 = vmatmul.mubr.bf16.gmra.mrb[0].mxu0 %v844
        %v1715 = vpop.f32.mrb[0].mxu0
        %v1716 = vadd.f32 0.0, %v1715
        %v1717 = vpop.f32.mrb[0].mxu0
        %v1718 = vpop.f32.mrb[0].mxu0
        %v1719 = vadd.f32 0.0, %v1718
        %v1720 = vpop.f32.mrb[0].mxu0
        %1721 = vmatprep.mubr.bf16.mxu0 0
        %1722 = vmatmul.mubr.bf16.gmra.mrb[0].mxu0 %v847
        %v1723 = vpop.f32.mrb[0].mxu0
        %v1724 = vadd.f32 0.0, %v1723
        %v1725 = vpop.f32.mrb[0].mxu0
        %v1726 = vpop.f32.mrb[0].mxu0
        %v1727 = vadd.f32 0.0, %v1726
        %v1728 = vpop.f32.mrb[0].mxu0
        %1729 = vmatprep.mubr.bf16.mxu0 0
        %1730 = vmatmul.mubr.bf16.gmra.mrb[0].mxu0 %v850
        %v1731 = vpop.f32.mrb[0].mxu0
        %v1732 = vadd.f32 0.0, %v1731
        %v1733 = vpop.f32.mrb[0].mxu0
        %v1734 = vpop.f32.mrb[0].mxu0
        %v1735 = vadd.f32 0.0, %v1734
        %v1736 = vpop.f32.mrb[0].mxu0
        %1737 = vmatprep.mubr.bf16.mxu0 0
        %1738 = vmatmul.mubr.bf16.gmra.mrb[0].mxu0 %v853
        %v1739 = vpop.f32.mrb[0].mxu0
        %v1740 = vadd.f32 0.0, %v1739
        %v1741 = vpop.f32.mrb[0].mxu0
        %v1742 = vpop.f32.mrb[0].mxu0
        %v1743 = vadd.f32 0.0, %v1742
        %v1744 = vpop.f32.mrb[0].mxu0
        %1745 = vmatprep.mubr.bf16.mxu0 0
        %1746 = vmatmul.mubr.bf16.gmra.mrb[0].mxu0 %v856
        %v1747 = vpop.f32.mrb[0].mxu0
        %v1748 = vadd.f32 0.0, %v1747
        %v1749 = vpop.f32.mrb[0].mxu0
        %v1750 = vpop.f32.mrb[0].mxu0
        %v1751 = vadd.f32 0.0, %v1750
        %v1752 = vpop.f32.mrb[0].mxu0
        %1753 = vmatprep.mubr.bf16.mxu0 0
        %1754 = vmatmul.mubr.bf16.gmra.mrb[0].mxu0 %v1262
        %v1755 = vpop.f32.mrb[0].mxu0
        %v1756 = vadd.f32 0.0, %v1755
        %v1757 = vpop.f32.mrb[0].mxu0
        %v1758 = vpop.f32.mrb[0].mxu0
        %v1759 = vadd.f32 0.0, %v1758
        %v1760 = vpop.f32.mrb[0].mxu0
        %1761 = vmatprep.mubr.bf16.mxu0 0
        %1762 = vmatmul.mubr.bf16.gmra.mrb[0].mxu0 %v1668
        %v1763 = vpop.f32.mrb[0].mxu0
        %v1764 = vadd.f32 0.0, %v1763
        %v1765 = vpop.f32.mrb[0].mxu0
        %v1766 = vpop.f32.mrb[0].mxu0
        %v1767 = vadd.f32 0.0, %v1766
        %v1768 = vpop.f32.mrb[0].mxu0
        %1769 = vdwg.mxu0
        %v1770 = vadd.f32 %v1638, %v1708
        %v1771 = vadd.f32 %v1639, %v1711
        %v1772 = vadd.f32 %v1640, %v1716
        %v1773 = vadd.f32 %v1641, %v1719
        %v1774 = vadd.f32 %v1642, %v1724
        %v1775 = vadd.f32 %v1643, %v1727
        %v1776 = vadd.f32 %v1644, %v1732
        %v1777 = vadd.f32 %v1645, %v1735
        %v1778 = vadd.f32 %v1646, %v1740
        %v1779 = vadd.f32 %v1647, %v1743
        %v1780 = vadd.f32 %v1648, %v1748
        %v1781 = vadd.f32 %v1649, %v1751
        %v1782 = vadd.f32 %v1650, %v1756
        %v1783 = vadd.f32 %v1651, %v1759
        %v1784 = vadd.f32 %v1652, %v1764
        %v1785 = vadd.f32 %v1653, %v1767
        %v1786 = vld [vmem:[%s2] sm:$0x1]
        %v1788 = vlaneseq
        %v1789 = vshrl.u32 %v1788, 7
        %v1790 = vsub.s32 0, %v1789
        %v1791 = vrot.slane %v1786, %v1790
        %v1793 = vadd.f32 %v1770, %v1791
        %v1794 = vadd.f32 %v1771, %v1791
        %v1795 = vadd.f32 %v1772, %v1791
        %v1796 = vadd.f32 %v1773, %v1791
        %v1797 = vadd.f32 %v1774, %v1791
        %v1798 = vadd.f32 %v1775, %v1791
        %v1799 = vadd.f32 %v1776, %v1791
        %v1800 = vadd.f32 %v1777, %v1791
        %v1801 = vadd.f32 %v1778, %v1791
        %v1802 = vadd.f32 %v1779, %v1791
        %v1803 = vadd.f32 %v1780, %v1791
        %v1804 = vadd.f32 %v1781, %v1791
        %v1805 = vadd.f32 %v1782, %v1791
        %v1806 = vadd.f32 %v1783, %v1791
        %v1807 = vadd.f32 %v1784, %v1791
        %v1808 = vadd.f32 %v1785, %v1791
        %v1809 = vmax.f32 %v1793, 0.0
        %v1810 = vmax.f32 %v1794, 0.0
        %v1811 = vmax.f32 %v1795, 0.0
        %v1812 = vmax.f32 %v1796, 0.0
        %v1813 = vmax.f32 %v1797, 0.0
        %v1814 = vmax.f32 %v1798, 0.0
        %v1815 = vmax.f32 %v1799, 0.0
        %v1816 = vmax.f32 %v1800, 0.0
        %v1817 = vmax.f32 %v1801, 0.0
        %v1818 = vmax.f32 %v1802, 0.0
        %v1819 = vmax.f32 %v1803, 0.0
        %v1820 = vmax.f32 %v1804, 0.0
        %v1821 = vmax.f32 %v1805, 0.0
        %v1822 = vmax.f32 %v1806, 0.0
        %v1823 = vmax.f32 %v1807, 0.0
        %v1824 = vmax.f32 %v1808, 0.0
        %vm1825 = vcmask 261120
        %1826 = vst.msk [vmem:[%s187] sm:$0xff] %vm1825, %v1809
        %1827 = vst.msk [vmem:[%s187 + $0x8] sm:$0xff] %vm1825, %v1810
        %1828 = vst.msk [vmem:[%s187 + $0x10] sm:$0xff] %vm1825, %v1811
        %1829 = vst.msk [vmem:[%s187 + $0x18] sm:$0xff] %vm1825, %v1812
        %1830 = vst.msk [vmem:[%s187 + $0x20] sm:$0xff] %vm1825, %v1813
        %1831 = vst.msk [vmem:[%s187 + $0x28] sm:$0xff] %vm1825, %v1814
        %1832 = vst.msk [vmem:[%s187 + $0x30] sm:$0xff] %vm1825, %v1815
        %1833 = vst.msk [vmem:[%s187 + $0x38] sm:$0xff] %vm1825, %v1816
        %1834 = vst.msk [vmem:[%s187 + $0x40] sm:$0xff] %vm1825, %v1817
        %1835 = vst.msk [vmem:[%s187 + $0x48] sm:$0xff] %vm1825, %v1818
        %1836 = vst.msk [vmem:[%s187 + $0x50] sm:$0xff] %vm1825, %v1819
        %1837 = vst.msk [vmem:[%s187 + $0x58] sm:$0xff] %vm1825, %v1820
        %1838 = vst.msk [vmem:[%s187 + $0x60] sm:$0xff] %vm1825, %v1821
        %1839 = vst.msk [vmem:[%s187 + $0x68] sm:$0xff] %vm1825, %v1822
        %1840 = vst.msk [vmem:[%s187 + $0x70] sm:$0xff] %vm1825, %v1823
        %1841 = vst.msk [vmem:[%s187 + $0x78] sm:$0xff] %vm1825, %v1824
        %s1842 = sand.u32 %s109, 1
        %s1843 = scalar_lea.sflag [#allocation3], %s1842
        %s1844 = sand.u32 %s109, 1
        %s1845 = smul.addr %s1844, 128
        %s1846 = scalar_lea.vmem [#allocation2], %s1845
        // Predicated region
        $region33: #{tpu_custom_call.1} parent=31 // pred_check
          %p1847 = pneg %p119
        $region34: #{tpu_custom_call.1} parent=31 // pred_check_branch
          %1849 = sbr.rel (%p1847) target = $region36
        $region35: #{tpu_custom_call.1} parent=31 // pred_region
          %s1850 = smul.u32 8, %s22
          %s1852 = ssub.s32 2048, 2048
          %1853 = vsyncadd %s1843, %s1852
          %s1854 = smul.addr %s1850, 2
          %s1855 = smul.addr %s21, 32
          %s1856 = sadd.s32 %s1854, %s1855
          %s1857 = smul.addr %s1856, 128
          %s1858 = scalar_lea.hbm %s3, %s1857
          %s1859 = sshll.u32 %s1846, 4
          %s1860 = int_to_ptr.vmem [resolvable:$true] %s1859
          %1865 = dma.vmem_to_hbm [thread:$0]  %s1860, 2048, %s1858, %s1843, 128, 128, 8
        $region36: #{tpu_custom_call.1} parent=31 // pred_fallthru
          _
      $region32: #{tpu_custom_call.1} parent=5 // pred_fallthru
        _
      %p1866 = scmp.le.s32.totalorder 2, %s12
      // Predicated region
      $region37: #{tpu_custom_call.1} parent=5 // pred_check
        %p1867 = pneg %p1866
      $region38: #{tpu_custom_call.1} parent=5 // pred_check_branch
        %1869 = sbr.rel (%p1867) target = $region40
      $region39: #{tpu_custom_call.1} parent=5 // pred_region
        %s1870 = ssub.s32 %s12, 2
        // Predicated region
        $region41: #{tpu_custom_call.1} parent=39 // pred_check
          %p1871 = pneg %p125
        $region42: #{tpu_custom_call.1} parent=39 // pred_check_branch
          %1873 = sbr.rel (%p1871) target = $region44
        $region43: #{tpu_custom_call.1} parent=39 // pred_region
          %s1874 = sand.u32 %s110, 1
          %s1875 = scalar_lea.sflag [#allocation3], %s1874
          %s1876 = sand.u32 %s110, 1
          %s1877 = smul.addr %s1876, 128
          %s1878 = scalar_lea.vmem [#allocation2], %s1877
          %1879 = dma.done %s1875, 2048
        $region44: #{tpu_custom_call.1} parent=39 // pred_fallthru
          _
      $region40: #{tpu_custom_call.1} parent=5 // pred_fallthru
        _
    $region6: #{tpu_custom_call.1} parent=1 // loop_footer
      %s16 = sadd.s32 1, %s12
    $region7: #{tpu_custom_call.1} parent=1 // loop_footer_branch
      %11 = sbr.rel target = $region3
    $region8: #{tpu_custom_call.1} parent=1 // loop_exit
      _
    %1880 = vsyncpa [#allocation3], 1
    %s1881 = scalar_lea.sflag [#allocation3], 1
    %1882 = vsyncpa %s1881, 1

</llo_original>
